<compile_context>
chip_gen: v6e
topology: v6e:2x2x1
jax: 0.10.0
libtpu: 0.0.40
codegen_flags: <defaults>
</compile_context>

<pallas_src>
import numpy as np
import jax
import jax.numpy as jnp
from jax.experimental import pallas as pl
from jax.experimental.pallas import tpu as pltpu


# ----------------------------- Pallas kernel ------------------------------ #

def _make_tcn_kernel(k, dilations, down_idx, T, C, Bb, mm_dtype):
    """Fused TCN stack. One grid step = Bb batch elements, kept flattened as
    (Bb*T, C) so every MXU matmul sees M = Bb*T rows."""
    n_blocks = len(dilations)
    has_down = any(di is not None for di in down_idx)
    M = Bb * T

    def kernel(*refs):
        x_ref = refs[0]
        conv_w_ref = refs[1]
        pos = 2
        down_w_ref = None
        if has_down:
            down_w_ref = refs[pos]
            pos += 1
        bias_ref = refs[pos]
        o_ref = refs[pos + 1]

        # Local time index within each batch element, built ONCE and reused by
        # every tap of every conv in every block (JAX does not CSE iota).
        t_local = jax.lax.broadcasted_iota(
            jnp.int32, (Bb, T, C), 1).reshape(M, C)

        def shift_time(v, s):
            # shifted[b, t] = v[b, t - s], zero for t < s (causal dilated tap).
            # Rolling the flattened (Bb*T, C) slab is safe: the rows that would
            # pick up the previous batch element (t < s) are masked to zero.
            if s == 0:
                return v
            if s >= T:
                return jnp.zeros_like(v)
            rolled = pltpu.roll(v, s, 0)                  # XLU sublane rotate
            return jnp.where(t_local >= s, rolled, 0.0)   # VPU wrap mask

        def causal_conv(v, w_i, b_i, dilation):
            # k taps fused into ONE matmul: (M, k*C) @ (k*C, C), so the MXU
            # sees K = k*C (=256 for k=2) instead of k separate K=128 passes.
            taps = [shift_time(v, (k - 1 - j) * dilation) for j in range(k)]
            lhs = taps[0] if k == 1 else jnp.concatenate(taps, axis=-1)
            out = jnp.dot(lhs.astype(mm_dtype), conv_w_ref[w_i],
                          preferred_element_type=jnp.float32)
            return out + bias_ref[b_i]

        cur = x_ref[...].reshape(M, C)      # (M, C) f32 activations
        w_i = 0
        b_i = 0
        for blk in range(n_blocks):
            d = dilations[blk]
            # conv1 -> ReLU -> conv2 -> ReLU
            h = jnp.maximum(causal_conv(cur, w_i, b_i, d), 0.0)
            h = jnp.maximum(causal_conv(h, w_i + 1, b_i + 1, d), 0.0)
            w_i += 2
            b_i += 2
            # residual branch (identity or 1x1 downsample conv)
            di = down_idx[blk]
            if di is not None:
                res = jnp.dot(cur.astype(mm_dtype), down_w_ref[di],
                              preferred_element_type=jnp.float32) + bias_ref[b_i]
                b_i += 1
            else:
                res = cur
            cur = jnp.maximum(h + res, 0.0)

        o_ref[...] = cur.reshape(Bb, T, C).astype(o_ref.dtype)

    return kernel


# ------------------------------ host wrapper ------------------------------- #

def _round_up(n, m=128):
    return ((n + m - 1) // m) * m


def _pad_last2(a, C):
    pads = [(0, 0)] * (a.ndim - 2) + [(0, C - a.shape[-2]), (0, C - a.shape[-1])]
    return jnp.pad(a, pads)


def _pad_bias(b, C):
    return jnp.pad(b, (0, C - b.shape[0]))


def _choose_batch_tile(B, T, target_m=256):
    """Aim for M = Bb*T >= target_m rows per matmul, but keep >= 2 grid steps
    when B >= 2 so dimension_semantics=('parallel',) can feed both v7x TCs."""
    Bb = max(1, -(-target_m // T))
    Bb = min(Bb, B)
    while Bb > 1 and -(-B // Bb) < 2:
        Bb -= 1
    return Bb


def tcn_stack_pallas(x, blocks, kernel_size, *, mm_dtype=jnp.bfloat16,
                     target_m=256):
    """x: (B, T, C_in) f32 -> (B, T, C_out_last) f32 via one fused pallas_call."""
    B, T, c_in = x.shape
    k = kernel_size
    c_last = blocks[-1]["w1"].shape[2]
    C = _round_up(max([c_in] + [blk["w1"].shape[2] for blk in blocks]), 128)

    Bb = _choose_batch_tile(B, T, target_m)
    B_pad = -(-B // Bb) * Bb

    x_p = jnp.pad(x.astype(jnp.float32),
                  ((0, B_pad - B), (0, 0), (0, C - c_in)))

    dilations = tuple(blk["dilation"] for blk in blocks)
    conv_ws, down_ws, biases, down_idx = [], [], [], []
    for blk in blocks:
        w1 = _pad_last2(blk["w1"], C).reshape(k * C, C).astype(mm_dtype)
        w2 = _pad_last2(blk["w2"], C).reshape(k * C, C).astype(mm_dtype)
        conv_ws += [w1, w2]
        biases += [_pad_bias(blk["b1"], C), _pad_bias(blk["b2"], C)]
        if blk["wd"] is not None:
            down_idx.append(len(down_ws))
            down_ws.append(_pad_last2(blk["wd"], C).astype(mm_dtype))
            biases.append(_pad_bias(blk["bd"], C))
        else:
            down_idx.append(None)

    conv_w = jnp.stack(conv_ws)                        # (n_conv, k*C, C) bf16
    bias = jnp.stack(biases).astype(jnp.float32)       # (n_bias, C)   f32

    args = [x_p, conv_w]
    in_specs = [pl.BlockSpec((Bb, T, C), lambda b: (b, 0, 0)),
                pl.BlockSpec(conv_w.shape, lambda b: (0, 0, 0))]
    down_w = None
    if down_ws:
        down_w = jnp.stack(down_ws)                    # (n_down, C, C) bf16
        args.append(down_w)
        in_specs.append(pl.BlockSpec(down_w.shape, lambda b: (0, 0, 0)))
    args.append(bias)
    in_specs.append(pl.BlockSpec(bias.shape, lambda b: (0, 0)))

    kernel = _make_tcn_kernel(k, dilations, tuple(down_idx), T, C, Bb, mm_dtype)

    # VMEM budget: double-buffered in/out activation blocks, resident weights,
    # and temporaries (k shifted copies + fused LHS + f32 accumulators).
    act = Bb * T * C * 4
    wbytes = conv_w.size * conv_w.dtype.itemsize + bias.size * 4
    if down_w is not None:
        wbytes += down_w.size * down_w.dtype.itemsize
    need = 4 * act + 2 * wbytes + (2 * k + 8) * act + (4 << 20)
    vmem_limit = int(min(max(need, 32 << 20), 100 << 20))

    out_p = pl.pallas_call(
        kernel,
        out_shape=jax.ShapeDtypeStruct((B_pad, T, C), jnp.float32),
        grid=(B_pad // Bb,),
        in_specs=in_specs,
        out_specs=pl.BlockSpec((Bb, T, C), lambda b: (b, 0, 0)),
        compiler_params=pltpu.CompilerParams(
            dimension_semantics=("parallel",),
            vmem_limit_bytes=vmem_limit),
    )(*args)

    return out_p[:B, :, :c_last]


# ------------------------------ glue / params ----------------------------- #

def get_last_visit(out, mask):
    # pyhealth.models.utils.get_last_visit semantics
    if mask is None:
        return out[:, -1, :]
    idx = jnp.sum(mask.astype(jnp.int32), axis=1) - 1
    return out[jnp.arange(out.shape[0]), idx, :]


def init_weightnorm_conv(key, c_in, c_out, k):
    kv, kb = jax.random.split(key)
    v = 0.01 * jax.random.normal(kv, (c_out, c_in, k), jnp.float32)  # PyTorch layout
    g = jnp.float32(1.0)
    w = g * v / jnp.sqrt(jnp.sum(v * v))          # weight_norm with dim=None
    w = jnp.transpose(w, (2, 1, 0))               # -> (k, c_in, c_out)
    b = 0.1 * jax.random.uniform(kb, (c_out,), jnp.float32, -1.0, 1.0)
    return w, b


def init_tcn_params(key, input_dim, num_channels, max_seq_length, kernel_size):
    # replicate TCNLayer.__init__ channel-list derivation
    if isinstance(num_channels, int):
        depth = int(np.ceil(np.log(max_seq_length / 2) / np.log(kernel_size)))
        num_channels = [num_channels] * depth
    blocks = []
    for i, c_out in enumerate(num_channels):
        c_in = input_dim if i == 0 else num_channels[i - 1]
        dilation = 2 ** i
        key, k1, k2, k3, k4 = jax.random.split(key, 5)
        w1, b1 = init_weightnorm_conv(k1, c_in, c_out, kernel_size)
        w2, b2 = init_weightnorm_conv(k2, c_out, c_out, kernel_size)
        if c_in != c_out:
            wd = 0.01 * jax.random.normal(k3, (c_in, c_out), jnp.float32)
            bd = 0.1 * jax.random.uniform(k4, (c_out,), jnp.float32, -1.0, 1.0)
        else:
            wd, bd = None, None
        blocks.append(dict(w1=w1, b1=b1, w2=w2, b2=b2, wd=wd, bd=bd,
                           dilation=dilation))
    return blocks


def tcn_forward(x, blocks, kernel_size, mask=None):
    out = tcn_stack_pallas(x, blocks, kernel_size)
    last_out = get_last_visit(out, mask)
    return last_out, out


# ----------------------------- pure-JAX reference -------------------------- #

def _causal_conv_ref(x, w, b, dilation):
    k, _, c_out = w.shape
    B, T, _ = x.shape
    out = jnp.zeros((B, T, c_out), jnp.float32)
    for j in range(k):
        s = (k - 1 - j) * dilation
        xs = x if s == 0 else jnp.pad(x, ((0, 0), (s, 0), (0, 0)))[:, :T, :]
        out = out + jnp.einsum("btc,cd->btd", xs, w[j])
    return out + b


def tcn_forward_ref(x, blocks, kernel_size, mask=None):
    out = x
    for p in blocks:
        h = jax.nn.relu(_causal_conv_ref(out, p["w1"], p["b1"], p["dilation"]))
        h = jax.nn.relu(_causal_conv_ref(h, p["w2"], p["b2"], p["dilation"]))
        res = out if p["wd"] is None else jnp.einsum("btc,cd->btd", out, p["wd"]) + p["bd"]
        out = jax.nn.relu(h + res)
    return get_last_visit(out, mask), out


# ---------------------------------- main ----------------------------------- #

if __name__ == "__main__":
    B, T, input_dim = 2, 16, 5
    num_channels = 32
    max_seq_length = 16
    kernel_size = 2

    key = jax.random.PRNGKey(0)
    kx, kp = jax.random.split(key)
    x = jax.random.normal(kx, (B, T, input_dim), jnp.float32)   # [batch, seq, input]

    blocks = init_tcn_params(kp, input_dim, num_channels, max_seq_length, kernel_size)

    last_out, out = tcn_forward(x, blocks, kernel_size, mask=None)
    jax.block_until_ready((last_out, out))

    last_ref, out_ref = tcn_forward_ref(x, blocks, kernel_size, mask=None)

    assert out.shape == (B, T, num_channels)
    assert last_out.shape == (B, num_channels)
    # bf16 matmuls (f32 accumulation) vs f32 reference: loosened tolerance.
    assert jnp.allclose(out, out_ref, atol=2e-2, rtol=2e-2), "outputs mismatch"
    assert jnp.allclose(last_out, last_ref, atol=2e-2, rtol=2e-2), "last_out mismatch"

    print("KERNEL_OK")
</pallas_src>

<mosaic_0001>
module attributes {stable_mosaic.version = 11 : i64} {
  func.func @kernel(%arg0: i32, %arg1: memref<1x16x128xf32, #tpu.memory_space<vmem>>, %arg2: memref<6x256x128xbf16, #tpu.memory_space<vmem>>, %arg3: memref<1x128x128xbf16, #tpu.memory_space<vmem>>, %arg4: memref<7x128xf32, #tpu.memory_space<vmem>>, %arg5: memref<1x16x128xf32, #tpu.memory_space<vmem>>) attributes {dimension_semantics = [#tpu.dimension_semantics<parallel>], iteration_bounds = array<i64: 2>, scalar_prefetch = 0 : i64, scratch_operands = 0 : i64, tpu.core_type = #tpu.core_type<tc>, window_params = [{transform_indices = @transform_0, window_bounds = array<i64: 1, 16, 128>}, {pipeline_mode = #tpu.pipeline_mode<synchronous>, transform_indices = @transform_1, window_bounds = array<i64: 6, 256, 128>}, {pipeline_mode = #tpu.pipeline_mode<synchronous>, transform_indices = @transform_2, window_bounds = array<i64: 1, 128, 128>}, {pipeline_mode = #tpu.pipeline_mode<synchronous>, transform_indices = @transform_3, window_bounds = array<i64: 7, 128>}, {transform_indices = @transform_4, window_bounds = array<i64: 1, 16, 128>}]} {
    %0 = tpu.iota {dimensions = array<i32: 1>} : vector<1x16x128xi32>
    %1 = vector.shape_cast %0 : vector<1x16x128xi32> to vector<16x128xi32>
    %c0 = arith.constant 0 : index
    %c0_0 = arith.constant 0 : index
    %c0_1 = arith.constant 0 : index
    %2 = vector.load %arg1[%c0, %c0_0, %c0_1] : memref<1x16x128xf32, #tpu.memory_space<vmem>>, vector<1x16x128xf32>
    %3 = vector.shape_cast %2 : vector<1x16x128xf32> to vector<16x128xf32>
    %c1_i32 = arith.constant 1 : i32
    %4 = tpu.dynamic_rotate %3 by %c1_i32 dim 0 : vector<16x128xf32>, i32 -> vector<16x128xf32>
    %c1_i32_2 = arith.constant 1 : i32
    %5 = vector.broadcast %c1_i32_2 : i32 to vector<16x128xi32>
    %6 = arith.cmpi sge, %1, %5 : vector<16x128xi32>
    %cst = arith.constant 0.000000e+00 : f32
    %7 = vector.broadcast %cst : f32 to vector<16x128xf32>
    %8 = arith.select %6, %4, %7 : vector<16x128xi1>, vector<16x128xf32>
    %9 = tpu.concatenate %8, %3 in 1 : vector<16x128xf32>, vector<16x128xf32> -> vector<16x256xf32>
    %10 = arith.truncf %9 : vector<16x256xf32> to vector<16x256xbf16>
    %c0_3 = arith.constant 0 : index
    %c0_4 = arith.constant 0 : index
    %c0_5 = arith.constant 0 : index
    %11 = vector.load %arg2[%c0_3, %c0_4, %c0_5] : memref<6x256x128xbf16, #tpu.memory_space<vmem>>, vector<1x256x128xbf16>
    %12 = vector.shape_cast %11 : vector<1x256x128xbf16> to vector<256x128xbf16>
    %cst_6 = arith.constant dense<0.000000e+00> : vector<16x128xf32>
    %13 = tpu.matmul %10, %12, %cst_6 {dimension_numbers = #tpu.dot_dimension_numbers<[1], [0], [0], [1], [0, 0, 1, 1], [], []>} : vector<16x256xbf16>, vector<256x128xbf16>, vector<16x128xf32> -> vector<16x128xf32>
    %c0_7 = arith.constant 0 : index
    %c0_8 = arith.constant 0 : index
    %14 = vector.load %arg4[%c0_7, %c0_8] : memref<7x128xf32, #tpu.memory_space<vmem>>, vector<1x128xf32>
    %15 = vector.shape_cast %14 : vector<1x128xf32> to vector<128xf32>
    %16 = vector.shape_cast %15 : vector<128xf32> to vector<1x128xf32>
    %17 = vector.broadcast %16 : vector<1x128xf32> to vector<16x128xf32>
    %18 = arith.addf %13, %17 : vector<16x128xf32>
    %cst_9 = arith.constant 0.000000e+00 : f32
    %19 = vector.broadcast %cst_9 : f32 to vector<16x128xf32>
    %20 = arith.maximumf %18, %19 : vector<16x128xf32>
    %c1_i32_10 = arith.constant 1 : i32
    %21 = tpu.dynamic_rotate %20 by %c1_i32_10 dim 0 : vector<16x128xf32>, i32 -> vector<16x128xf32>
    %c1_i32_11 = arith.constant 1 : i32
    %22 = vector.broadcast %c1_i32_11 : i32 to vector<16x128xi32>
    %23 = arith.cmpi sge, %1, %22 : vector<16x128xi32>
    %cst_12 = arith.constant 0.000000e+00 : f32
    %24 = vector.broadcast %cst_12 : f32 to vector<16x128xf32>
    %25 = arith.select %23, %21, %24 : vector<16x128xi1>, vector<16x128xf32>
    %26 = tpu.concatenate %25, %20 in 1 : vector<16x128xf32>, vector<16x128xf32> -> vector<16x256xf32>
    %27 = arith.truncf %26 : vector<16x256xf32> to vector<16x256xbf16>
    %c1 = arith.constant 1 : index
    %c0_13 = arith.constant 0 : index
    %c0_14 = arith.constant 0 : index
    %28 = vector.load %arg2[%c1, %c0_13, %c0_14] : memref<6x256x128xbf16, #tpu.memory_space<vmem>>, vector<1x256x128xbf16>
    %29 = vector.shape_cast %28 : vector<1x256x128xbf16> to vector<256x128xbf16>
    %cst_15 = arith.constant dense<0.000000e+00> : vector<16x128xf32>
    %30 = tpu.matmul %27, %29, %cst_15 {dimension_numbers = #tpu.dot_dimension_numbers<[1], [0], [0], [1], [0, 0, 1, 1], [], []>} : vector<16x256xbf16>, vector<256x128xbf16>, vector<16x128xf32> -> vector<16x128xf32>
    %c1_16 = arith.constant 1 : index
    %c0_17 = arith.constant 0 : index
    %31 = vector.load %arg4[%c1_16, %c0_17] : memref<7x128xf32, #tpu.memory_space<vmem>>, vector<1x128xf32>
    %32 = vector.shape_cast %31 : vector<1x128xf32> to vector<128xf32>
    %33 = vector.shape_cast %32 : vector<128xf32> to vector<1x128xf32>
    %34 = vector.broadcast %33 : vector<1x128xf32> to vector<16x128xf32>
    %35 = arith.addf %30, %34 : vector<16x128xf32>
    %cst_18 = arith.constant 0.000000e+00 : f32
    %36 = vector.broadcast %cst_18 : f32 to vector<16x128xf32>
    %37 = arith.maximumf %35, %36 : vector<16x128xf32>
    %38 = arith.truncf %3 : vector<16x128xf32> to vector<16x128xbf16>
    %c0_19 = arith.constant 0 : index
    %c0_20 = arith.constant 0 : index
    %c0_21 = arith.constant 0 : index
    %39 = vector.load %arg3[%c0_19, %c0_20, %c0_21] : memref<1x128x128xbf16, #tpu.memory_space<vmem>>, vector<1x128x128xbf16>
    %40 = vector.shape_cast %39 : vector<1x128x128xbf16> to vector<128x128xbf16>
    %cst_22 = arith.constant dense<0.000000e+00> : vector<16x128xf32>
    %41 = tpu.matmul %38, %40, %cst_22 {dimension_numbers = #tpu.dot_dimension_numbers<[1], [0], [0], [1], [0, 0, 1, 1], [], []>} : vector<16x128xbf16>, vector<128x128xbf16>, vector<16x128xf32> -> vector<16x128xf32>
    %c2 = arith.constant 2 : index
    %c0_23 = arith.constant 0 : index
    %42 = vector.load %arg4[%c2, %c0_23] : memref<7x128xf32, #tpu.memory_space<vmem>>, vector<1x128xf32>
    %43 = vector.shape_cast %42 : vector<1x128xf32> to vector<128xf32>
    %44 = vector.shape_cast %43 : vector<128xf32> to vector<1x128xf32>
    %45 = vector.broadcast %44 : vector<1x128xf32> to vector<16x128xf32>
    %46 = arith.addf %41, %45 : vector<16x128xf32>
    %47 = arith.addf %37, %46 : vector<16x128xf32>
    %cst_24 = arith.constant 0.000000e+00 : f32
    %48 = vector.broadcast %cst_24 : f32 to vector<16x128xf32>
    %49 = arith.maximumf %47, %48 : vector<16x128xf32>
    %c2_i32 = arith.constant 2 : i32
    %50 = tpu.dynamic_rotate %49 by %c2_i32 dim 0 : vector<16x128xf32>, i32 -> vector<16x128xf32>
    %c2_i32_25 = arith.constant 2 : i32
    %51 = vector.broadcast %c2_i32_25 : i32 to vector<16x128xi32>
    %52 = arith.cmpi sge, %1, %51 : vector<16x128xi32>
    %cst_26 = arith.constant 0.000000e+00 : f32
    %53 = vector.broadcast %cst_26 : f32 to vector<16x128xf32>
    %54 = arith.select %52, %50, %53 : vector<16x128xi1>, vector<16x128xf32>
    %55 = tpu.concatenate %54, %49 in 1 : vector<16x128xf32>, vector<16x128xf32> -> vector<16x256xf32>
    %56 = arith.truncf %55 : vector<16x256xf32> to vector<16x256xbf16>
    %c2_27 = arith.constant 2 : index
    %c0_28 = arith.constant 0 : index
    %c0_29 = arith.constant 0 : index
    %57 = vector.load %arg2[%c2_27, %c0_28, %c0_29] : memref<6x256x128xbf16, #tpu.memory_space<vmem>>, vector<1x256x128xbf16>
    %58 = vector.shape_cast %57 : vector<1x256x128xbf16> to vector<256x128xbf16>
    %cst_30 = arith.constant dense<0.000000e+00> : vector<16x128xf32>
    %59 = tpu.matmul %56, %58, %cst_30 {dimension_numbers = #tpu.dot_dimension_numbers<[1], [0], [0], [1], [0, 0, 1, 1], [], []>} : vector<16x256xbf16>, vector<256x128xbf16>, vector<16x128xf32> -> vector<16x128xf32>
    %c3 = arith.constant 3 : index
    %c0_31 = arith.constant 0 : index
    %60 = vector.load %arg4[%c3, %c0_31] : memref<7x128xf32, #tpu.memory_space<vmem>>, vector<1x128xf32>
    %61 = vector.shape_cast %60 : vector<1x128xf32> to vector<128xf32>
    %62 = vector.shape_cast %61 : vector<128xf32> to vector<1x128xf32>
    %63 = vector.broadcast %62 : vector<1x128xf32> to vector<16x128xf32>
    %64 = arith.addf %59, %63 : vector<16x128xf32>
    %cst_32 = arith.constant 0.000000e+00 : f32
    %65 = vector.broadcast %cst_32 : f32 to vector<16x128xf32>
    %66 = arith.maximumf %64, %65 : vector<16x128xf32>
    %c2_i32_33 = arith.constant 2 : i32
    %67 = tpu.dynamic_rotate %66 by %c2_i32_33 dim 0 : vector<16x128xf32>, i32 -> vector<16x128xf32>
    %c2_i32_34 = arith.constant 2 : i32
    %68 = vector.broadcast %c2_i32_34 : i32 to vector<16x128xi32>
    %69 = arith.cmpi sge, %1, %68 : vector<16x128xi32>
    %cst_35 = arith.constant 0.000000e+00 : f32
    %70 = vector.broadcast %cst_35 : f32 to vector<16x128xf32>
    %71 = arith.select %69, %67, %70 : vector<16x128xi1>, vector<16x128xf32>
    %72 = tpu.concatenate %71, %66 in 1 : vector<16x128xf32>, vector<16x128xf32> -> vector<16x256xf32>
    %73 = arith.truncf %72 : vector<16x256xf32> to vector<16x256xbf16>
    %c3_36 = arith.constant 3 : index
    %c0_37 = arith.constant 0 : index
    %c0_38 = arith.constant 0 : index
    %74 = vector.load %arg2[%c3_36, %c0_37, %c0_38] : memref<6x256x128xbf16, #tpu.memory_space<vmem>>, vector<1x256x128xbf16>
    %75 = vector.shape_cast %74 : vector<1x256x128xbf16> to vector<256x128xbf16>
    %cst_39 = arith.constant dense<0.000000e+00> : vector<16x128xf32>
    %76 = tpu.matmul %73, %75, %cst_39 {dimension_numbers = #tpu.dot_dimension_numbers<[1], [0], [0], [1], [0, 0, 1, 1], [], []>} : vector<16x256xbf16>, vector<256x128xbf16>, vector<16x128xf32> -> vector<16x128xf32>
    %c4 = arith.constant 4 : index
    %c0_40 = arith.constant 0 : index
    %77 = vector.load %arg4[%c4, %c0_40] : memref<7x128xf32, #tpu.memory_space<vmem>>, vector<1x128xf32>
    %78 = vector.shape_cast %77 : vector<1x128xf32> to vector<128xf32>
    %79 = vector.shape_cast %78 : vector<128xf32> to vector<1x128xf32>
    %80 = vector.broadcast %79 : vector<1x128xf32> to vector<16x128xf32>
    %81 = arith.addf %76, %80 : vector<16x128xf32>
    %cst_41 = arith.constant 0.000000e+00 : f32
    %82 = vector.broadcast %cst_41 : f32 to vector<16x128xf32>
    %83 = arith.maximumf %81, %82 : vector<16x128xf32>
    %84 = arith.addf %83, %49 : vector<16x128xf32>
    %cst_42 = arith.constant 0.000000e+00 : f32
    %85 = vector.broadcast %cst_42 : f32 to vector<16x128xf32>
    %86 = arith.maximumf %84, %85 : vector<16x128xf32>
    %c4_i32 = arith.constant 4 : i32
    %87 = tpu.dynamic_rotate %86 by %c4_i32 dim 0 : vector<16x128xf32>, i32 -> vector<16x128xf32>
    %c4_i32_43 = arith.constant 4 : i32
    %88 = vector.broadcast %c4_i32_43 : i32 to vector<16x128xi32>
    %89 = arith.cmpi sge, %1, %88 : vector<16x128xi32>
    %cst_44 = arith.constant 0.000000e+00 : f32
    %90 = vector.broadcast %cst_44 : f32 to vector<16x128xf32>
    %91 = arith.select %89, %87, %90 : vector<16x128xi1>, vector<16x128xf32>
    %92 = tpu.concatenate %91, %86 in 1 : vector<16x128xf32>, vector<16x128xf32> -> vector<16x256xf32>
    %93 = arith.truncf %92 : vector<16x256xf32> to vector<16x256xbf16>
    %c4_45 = arith.constant 4 : index
    %c0_46 = arith.constant 0 : index
    %c0_47 = arith.constant 0 : index
    %94 = vector.load %arg2[%c4_45, %c0_46, %c0_47] : memref<6x256x128xbf16, #tpu.memory_space<vmem>>, vector<1x256x128xbf16>
    %95 = vector.shape_cast %94 : vector<1x256x128xbf16> to vector<256x128xbf16>
    %cst_48 = arith.constant dense<0.000000e+00> : vector<16x128xf32>
    %96 = tpu.matmul %93, %95, %cst_48 {dimension_numbers = #tpu.dot_dimension_numbers<[1], [0], [0], [1], [0, 0, 1, 1], [], []>} : vector<16x256xbf16>, vector<256x128xbf16>, vector<16x128xf32> -> vector<16x128xf32>
    %c5 = arith.constant 5 : index
    %c0_49 = arith.constant 0 : index
    %97 = vector.load %arg4[%c5, %c0_49] : memref<7x128xf32, #tpu.memory_space<vmem>>, vector<1x128xf32>
    %98 = vector.shape_cast %97 : vector<1x128xf32> to vector<128xf32>
    %99 = vector.shape_cast %98 : vector<128xf32> to vector<1x128xf32>
    %100 = vector.broadcast %99 : vector<1x128xf32> to vector<16x128xf32>
    %101 = arith.addf %96, %100 : vector<16x128xf32>
    %cst_50 = arith.constant 0.000000e+00 : f32
    %102 = vector.broadcast %cst_50 : f32 to vector<16x128xf32>
    %103 = arith.maximumf %101, %102 : vector<16x128xf32>
    %c4_i32_51 = arith.constant 4 : i32
    %104 = tpu.dynamic_rotate %103 by %c4_i32_51 dim 0 : vector<16x128xf32>, i32 -> vector<16x128xf32>
    %c4_i32_52 = arith.constant 4 : i32
    %105 = vector.broadcast %c4_i32_52 : i32 to vector<16x128xi32>
    %106 = arith.cmpi sge, %1, %105 : vector<16x128xi32>
    %cst_53 = arith.constant 0.000000e+00 : f32
    %107 = vector.broadcast %cst_53 : f32 to vector<16x128xf32>
    %108 = arith.select %106, %104, %107 : vector<16x128xi1>, vector<16x128xf32>
    %109 = tpu.concatenate %108, %103 in 1 : vector<16x128xf32>, vector<16x128xf32> -> vector<16x256xf32>
    %110 = arith.truncf %109 : vector<16x256xf32> to vector<16x256xbf16>
    %c5_54 = arith.constant 5 : index
    %c0_55 = arith.constant 0 : index
    %c0_56 = arith.constant 0 : index
    %111 = vector.load %arg2[%c5_54, %c0_55, %c0_56] : memref<6x256x128xbf16, #tpu.memory_space<vmem>>, vector<1x256x128xbf16>
    %112 = vector.shape_cast %111 : vector<1x256x128xbf16> to vector<256x128xbf16>
    %cst_57 = arith.constant dense<0.000000e+00> : vector<16x128xf32>
    %113 = tpu.matmul %110, %112, %cst_57 {dimension_numbers = #tpu.dot_dimension_numbers<[1], [0], [0], [1], [0, 0, 1, 1], [], []>} : vector<16x256xbf16>, vector<256x128xbf16>, vector<16x128xf32> -> vector<16x128xf32>
    %c6 = arith.constant 6 : index
    %c0_58 = arith.constant 0 : index
    %114 = vector.load %arg4[%c6, %c0_58] : memref<7x128xf32, #tpu.memory_space<vmem>>, vector<1x128xf32>
    %115 = vector.shape_cast %114 : vector<1x128xf32> to vector<128xf32>
    %116 = vector.shape_cast %115 : vector<128xf32> to vector<1x128xf32>
    %117 = vector.broadcast %116 : vector<1x128xf32> to vector<16x128xf32>
    %118 = arith.addf %113, %117 : vector<16x128xf32>
    %cst_59 = arith.constant 0.000000e+00 : f32
    %119 = vector.broadcast %cst_59 : f32 to vector<16x128xf32>
    %120 = arith.maximumf %118, %119 : vector<16x128xf32>
    %121 = arith.addf %120, %86 : vector<16x128xf32>
    %cst_60 = arith.constant 0.000000e+00 : f32
    %122 = vector.broadcast %cst_60 : f32 to vector<16x128xf32>
    %123 = arith.maximumf %121, %122 : vector<16x128xf32>
    %124 = vector.shape_cast %123 : vector<16x128xf32> to vector<1x16x128xf32>
    %c0_61 = arith.constant 0 : index
    %c0_62 = arith.constant 0 : index
    %c0_63 = arith.constant 0 : index
    %125 = vector.load %arg5[%c0_61, %c0_62, %c0_63] : memref<1x16x128xf32, #tpu.memory_space<vmem>>, vector<1x16x128xf32>
    tpu.vector_store %arg5[%c0_61, %c0_62, %c0_63], %124 {strides = array<i32>} : memref<1x16x128xf32, #tpu.memory_space<vmem>>, vector<1x16x128xf32>,
    return
  }
  func.func @transform_0(%arg0: i32) -> (i32, i32, i32) {
    %c0_i32 = arith.constant 0 : i32
    %c0_i32_0 = arith.constant 0 : i32
    %c0_i32_1 = arith.constant 0 : i32
    return %arg0, %c0_i32, %c0_i32_0 : i32, i32, i32
  }
  func.func @transform_1(%arg0: i32) -> (i32, i32, i32) {
    %c0_i32 = arith.constant 0 : i32
    %c0_i32_0 = arith.constant 0 : i32
    %c0_i32_1 = arith.constant 0 : i32
    %c0_i32_2 = arith.constant 0 : i32
    return %c0_i32, %c0_i32_0, %c0_i32_1 : i32, i32, i32
  }
  func.func @transform_2(%arg0: i32) -> (i32, i32, i32) {
    %c0_i32 = arith.constant 0 : i32
    %c0_i32_0 = arith.constant 0 : i32
    %c0_i32_1 = arith.constant 0 : i32
    %c0_i32_2 = arith.constant 0 : i32
    return %c0_i32, %c0_i32_0, %c0_i32_1 : i32, i32, i32
  }
  func.func @transform_3(%arg0: i32) -> (i32, i32) {
    %c0_i32 = arith.constant 0 : i32
    %c0_i32_0 = arith.constant 0 : i32
    %c0_i32_1 = arith.constant 0 : i32
    return %c0_i32, %c0_i32_0 : i32, i32
  }
  func.func @transform_4(%arg0: i32) -> (i32, i32, i32) {
    %c0_i32 = arith.constant 0 : i32
    %c0_i32_0 = arith.constant 0 : i32
    %c0_i32_1 = arith.constant 0 : i32
    return %arg0, %c0_i32, %c0_i32_0 : i32, i32, i32
  }
}

</mosaic_0001>

<llo_original>
// kernel: tpu_custom_call.1
$region0: #{tpu_custom_call.1}
  #allocation0 [shape = 'u32[]', space=smem, size = 0x4, offset = 0x4, fixed_abs, tag = 'smem constant byte address 0x4 - core index']
  #allocation1 [shape = 'u32[144,128]{1,0:T(1,128)}', space=vmem, size = 0x12000, scoped, tag = 'internal scratch']
  %s0 = inlined_call_operand.hbm [shape: f32[2,16,128], index: 0, kind: input, shape index: {}]
  %s1 = inlined_call_operand.hbm [shape: bf16[6,256,128], index: 1, kind: input, shape index: {}]
  %s2 = inlined_call_operand.hbm [shape: bf16[1,128,128], index: 2, kind: input, shape index: {}]
  %s3 = inlined_call_operand.hbm [shape: f32[7,128], index: 3, kind: input, shape index: {}]
  %s4 = inlined_call_operand.hbm [shape: f32[2,16,128], index: 4, kind: output, shape index: {}]
  %s5 = sld [smem:[#allocation0]]
  $region65: #{tpu_custom_call.1} parent=0
    _
  %s7 = ssub.s32 1, %s5
  %s8 = scalar_select 0, %s7, %s5
  $region1: #{tpu_custom_call.1} parent=0
    #allocation2 [shape = 'u8[16384]{0}', space=vmem, size = 0x4000, scoped, tag = 'input window, operand 0']
    #allocation3 [shape = 's32[2]{0}', space=sflag, size = 0x8, scoped, tag = 'scoped memory for tpu_custom_call.1']
    #allocation4 [shape = 's32[2]{0}', space=sflag, size = 0x8, scoped, tag = 'scoped memory for tpu_custom_call.1']
    #allocation5 [shape = 'u8[393216]{0}', space=vmem, size = 0x60000, scoped, tag = 'input window, operand 1, single buffered']
    #allocation6 [shape = 's32[1]{0}', space=sflag, size = 0x4, scoped, tag = 'scoped memory for tpu_custom_call.1']
    #allocation7 [shape = 'u8[32768]{0}', space=vmem, size = 0x8000, scoped, tag = 'input window, operand 2, single buffered']
    #allocation8 [shape = 'u8[4096]{0}', space=vmem, size = 0x1000, scoped, tag = 'input window, operand 3, single buffered']
    #allocation9 [shape = 's32[1]{0}', space=sflag, size = 0x4, scoped, tag = 'scoped memory for tpu_custom_call.1']
    #allocation10 [shape = 'u8[16384]{0}', space=vmem, size = 0x4000, scoped, tag = 'output window, operand 0']
    %9 = vsyncpa [#allocation3], 0
    %s10 = scalar_lea.sflag [#allocation3], 1
    %11 = vsyncpa %s10, 0
    %12 = vsyncpa [#allocation6], 0
    %13 = vsyncpa [#allocation9], 0
    %14 = vsyncpa [#allocation4], 0
    %s15 = scalar_lea.sflag [#allocation4], 1
    %16 = vsyncpa %s15, 0
    loop: start=0, step=1, limit=4
    $region2: #{tpu_custom_call.1} parent=1 // loop_pre_header
      _
    $region3: #{tpu_custom_call.1} parent=1 // loop_header
      %s18 = sphi 0, %s22
      %p19 = scmp.ge.s32.totalorder %s18, 4
      %s28 = sphi 0, %s30
      %s31 = sphi 0, %s28
      %s32 = sphi 0, %s31
      %s48 = sphi 0, %s32
      %s52 = sphi 0, %s52
      %s54 = sphi 0, %s52
      %s55 = sphi 0, %s54
      %s69 = sphi 0, %s55
      %s73 = sphi 0, %s73
      %s75 = sphi 0, %s73
      %s76 = sphi 0, %s75
      %s90 = sphi 0, %s76
      %s94 = sphi 0, %s94
      %s96 = sphi 0, %s94
      %s97 = sphi 0, %s96
      %s111 = sphi 0, %s97
      %s117 = sphi 0, %s119
      %s120 = sphi 0, %s117
      %s121 = sphi 0, %s120
      %s137 = sphi 0, %s121
    $region4: #{tpu_custom_call.1} parent=1 // loop_header_branch
      %21 = sbr.rel (%p19) target = $region8
    $region5: #{tpu_custom_call.1} parent=1 // loop_body
      %s23 = ssub.s32 %s18, 1
      %s24 = ssub.s32 %s18, 2
      %s25 = sadd.s32 %s18, 1
      %s26 = ssub.s32 %s18, %s25
      %p27 = scmp.eq.s32.totalorder %s26, 0
      %s29 = sadd.s32 %s28, 1
      %s30 = scalar_select %p27, %s28, %s29
      %p33 = pneg %p27
      %p34 = scmp.eq.s32.totalorder %s18, 1
      %p35 = por %p33, %p34
      %p36 = scmp.ne.s32.totalorder %s28, %s31
      %p37 = scmp.eq.s32.totalorder %s18, 0
      %p38 = por %p36, %p37
      %p39 = scmp.ne.s32.totalorder %s28, %s31
      %p40 = scmp.eq.s32.totalorder %s23, 1
      %p41 = por %p39, %p40
      %p42 = scmp.ne.s32.totalorder %s31, %s32
      %p43 = scmp.eq.s32.totalorder %s23, 0
      %p44 = por %p42, %p43
      %p45 = scmp.ne.s32.totalorder %s31, %s32
      %p46 = scmp.eq.s32.totalorder %s24, 1
      %p47 = por %p45, %p46
      %p49 = scmp.ne.s32.totalorder %s32, %s48
      %p50 = scmp.eq.s32.totalorder %s24, 0
      %p51 = por %p49, %p50
      %s53 = sadd.s32 %s52, 1
      %p56 = scmp.eq.s32.totalorder %s18, 1
      %p57 = scmp.ne.s32.totalorder %s52, %s54
      %p58 = scmp.eq.s32.totalorder %s18, 0
      %p59 = por %p57, %p58
      %p60 = scmp.ne.s32.totalorder %s52, %s54
      %p61 = scmp.eq.s32.totalorder %s23, 1
      %p62 = por %p60, %p61
      %p63 = scmp.ne.s32.totalorder %s54, %s55
      %p64 = scmp.eq.s32.totalorder %s23, 0
      %p65 = por %p63, %p64
      %p66 = scmp.ne.s32.totalorder %s54, %s55
      %p67 = scmp.eq.s32.totalorder %s24, 1
      %p68 = por %p66, %p67
      %p70 = scmp.ne.s32.totalorder %s55, %s69
      %p71 = scmp.eq.s32.totalorder %s24, 0
      %p72 = por %p70, %p71
      %s74 = sadd.s32 %s73, 1
      %p77 = scmp.eq.s32.totalorder %s18, 1
      %p78 = scmp.ne.s32.totalorder %s73, %s75
      %p79 = scmp.eq.s32.totalorder %s18, 0
      %p80 = por %p78, %p79
      %p81 = scmp.ne.s32.totalorder %s73, %s75
      %p82 = scmp.eq.s32.totalorder %s23, 1
      %p83 = por %p81, %p82
      %p84 = scmp.ne.s32.totalorder %s75, %s76
      %p85 = scmp.eq.s32.totalorder %s23, 0
      %p86 = por %p84, %p85
      %p87 = scmp.ne.s32.totalorder %s75, %s76
      %p88 = scmp.eq.s32.totalorder %s24, 1
      %p89 = por %p87, %p88
      %p91 = scmp.ne.s32.totalorder %s76, %s90
      %p92 = scmp.eq.s32.totalorder %s24, 0
      %p93 = por %p91, %p92
      %s95 = sadd.s32 %s94, 1
      %p98 = scmp.eq.s32.totalorder %s18, 1
      %p99 = scmp.ne.s32.totalorder %s94, %s96
      %p100 = scmp.eq.s32.totalorder %s18, 0
      %p101 = por %p99, %p100
      %p102 = scmp.ne.s32.totalorder %s94, %s96
      %p103 = scmp.eq.s32.totalorder %s23, 1
      %p104 = por %p102, %p103
      %p105 = scmp.ne.s32.totalorder %s96, %s97
      %p106 = scmp.eq.s32.totalorder %s23, 0
      %p107 = por %p105, %p106
      %p108 = scmp.ne.s32.totalorder %s96, %s97
      %p109 = scmp.eq.s32.totalorder %s24, 1
      %p110 = por %p108, %p109
      %p112 = scmp.ne.s32.totalorder %s97, %s111
      %p113 = scmp.eq.s32.totalorder %s24, 0
      %p114 = por %p112, %p113
      %s115 = ssub.s32 %s18, %s25
      %p116 = scmp.eq.s32.totalorder %s115, 0
      %s118 = sadd.s32 %s117, 1
      %s119 = scalar_select %p116, %s117, %s118
      %p122 = pneg %p116
      %p123 = scmp.eq.s32.totalorder %s18, 1
      %p124 = por %p122, %p123
      %p125 = scmp.ne.s32.totalorder %s117, %s120
      %p126 = scmp.eq.s32.totalorder %s18, 0
      %p127 = por %p125, %p126
      %p128 = scmp.ne.s32.totalorder %s117, %s120
      %p129 = scmp.eq.s32.totalorder %s23, 1
      %p130 = por %p128, %p129
      %p131 = scmp.ne.s32.totalorder %s120, %s121
      %p132 = scmp.eq.s32.totalorder %s23, 0
      %p133 = por %p131, %p132
      %p134 = scmp.ne.s32.totalorder %s120, %s121
      %p135 = scmp.eq.s32.totalorder %s24, 1
      %p136 = por %p134, %p135
      %p138 = scmp.ne.s32.totalorder %s121, %s137
      %p139 = scmp.eq.s32.totalorder %s24, 0
      %p140 = por %p138, %p139
      %p141 = scmp.le.s32.totalorder 1, %s18
      %p142 = scmp.lt.s32.totalorder %s18, 3
      %p143 = pnand %p141, %p142
      %p144 = pneg %p143
      // Predicated region
      $region9: #{tpu_custom_call.1} parent=5 // pred_check
        _
      $region10: #{tpu_custom_call.1} parent=5 // pred_check_branch
        %146 = sbr.rel (%p143) target = $region12
      $region11: #{tpu_custom_call.1} parent=5 // pred_region
        %s147 = ssub.s32 %s18, 1
        // Predicated region
        $region13: #{tpu_custom_call.1} parent=11 // pred_check
          %p148 = pneg %p65
        $region14: #{tpu_custom_call.1} parent=11 // pred_check_branch
          %150 = sbr.rel (%p148) target = $region16
        $region15: #{tpu_custom_call.1} parent=11 // pred_region
          %s152 = ssub.s32 12288, 12288
          %153 = vsyncadd [#allocation6], %s152
          %s154 = sshll.u32 [#allocation5], 4
          %s155 = int_to_ptr.vmem [resolvable:$true] %s154
          %160 = dma.hbm_to_vmem [thread:$0]  %s1, 12288, %s155, [#allocation6], 64, 64, 4
        $region16: #{tpu_custom_call.1} parent=11 // pred_fallthru
          _
        // Predicated region
        $region17: #{tpu_custom_call.1} parent=11 // pred_check
          %p161 = pneg %p86
        $region18: #{tpu_custom_call.1} parent=11 // pred_check_branch
          %163 = sbr.rel (%p161) target = $region20
        $region19: #{tpu_custom_call.1} parent=11 // pred_region
          %s165 = ssub.s32 1024, 1024
          %166 = vsyncadd [#allocation6], %s165
          %s167 = sshll.u32 [#allocation7], 4
          %s168 = int_to_ptr.vmem [resolvable:$true] %s167
          %173 = dma.hbm_to_vmem [thread:$0]  %s2, 1024, %s168, [#allocation6], 64, 64, 4
        $region20: #{tpu_custom_call.1} parent=11 // pred_fallthru
          _
        // Predicated region
        $region21: #{tpu_custom_call.1} parent=11 // pred_check
          %p174 = pneg %p107
        $region22: #{tpu_custom_call.1} parent=11 // pred_check_branch
          %176 = sbr.rel (%p174) target = $region24
        $region23: #{tpu_custom_call.1} parent=11 // pred_region
          %s178 = ssub.s32 128, 128
          %179 = vsyncadd [#allocation9], %s178
          %s181 = sshll.u32 [#allocation8], 4
          %s182 = int_to_ptr.vmem [resolvable:$true] %s181
          %184 = dma.hbm_to_vmem [thread:$0]  %s3, 128, %s182, [#allocation9]
        $region24: #{tpu_custom_call.1} parent=11 // pred_fallthru
          _
      $region12: #{tpu_custom_call.1} parent=5 // pred_fallthru
        _
      %p185 = scmp.lt.s32.totalorder %s18, 2
      // Predicated region
      $region25: #{tpu_custom_call.1} parent=5 // pred_check
        %p186 = pneg %p185
      $region26: #{tpu_custom_call.1} parent=5 // pred_check_branch
        %188 = sbr.rel (%p186) target = $region28
      $region27: #{tpu_custom_call.1} parent=5 // pred_region
        // Predicated region
        $region29: #{tpu_custom_call.1} parent=27 // pred_check
          %p189 = pneg %p38
        $region30: #{tpu_custom_call.1} parent=27 // pred_check_branch
          %191 = sbr.rel (%p189) target = $region32
        $region31: #{tpu_custom_call.1} parent=27 // pred_region
          %s192 = sand.u32 %s28, 1
          %s193 = scalar_lea.sflag [#allocation3], %s192
          %s194 = sand.u32 %s28, 1
          %s195 = smul.addr %s194, 16
          %s196 = scalar_lea.vmem [#allocation2], %s195
          %s198 = ssub.s32 256, 256
          %199 = vsyncadd %s193, %s198
          %s200 = smul.addr %s18, 2
          %s201 = smul.addr %s200, 128
          %s202 = scalar_lea.hbm %s0, %s201
          %s203 = sshll.u32 %s196, 4
          %s204 = int_to_ptr.vmem [resolvable:$true] %s203
          %209 = dma.hbm_to_vmem [thread:$0]  %s202, 256, %s204, %s193, 128, 128, 8
        $region32: #{tpu_custom_call.1} parent=27 // pred_fallthru
          _
      $region28: #{tpu_custom_call.1} parent=5 // pred_fallthru
        _
      %p210 = scmp.le.s32.totalorder 1, %s18
      %p211 = scmp.lt.s32.totalorder %s18, 3
      %p212 = pnand %p210, %p211
      %p213 = pneg %p212
      // Predicated region
      $region33: #{tpu_custom_call.1} parent=5 // pred_check
        _
      $region34: #{tpu_custom_call.1} parent=5 // pred_check_branch
        %215 = sbr.rel (%p212) target = $region36
      $region35: #{tpu_custom_call.1} parent=5 // pred_region
        %s216 = ssub.s32 %s18, 1
        %s217 = sand.u32 %s31, 1
        %s218 = scalar_lea.sflag [#allocation3], %s217
        %s219 = sand.u32 %s31, 1
        %s220 = smul.addr %s219, 16
        %s221 = scalar_lea.vmem [#allocation2], %s220
        // Predicated region
        $region37: #{tpu_custom_call.1} parent=35 // pred_check
          %p222 = pneg %p44
        $region38: #{tpu_custom_call.1} parent=35 // pred_check_branch
          %224 = sbr.rel (%p222) target = $region40
        $region39: #{tpu_custom_call.1} parent=35 // pred_region
          %225 = dma.done %s218, 256
        $region40: #{tpu_custom_call.1} parent=35 // pred_fallthru
          _
        // Predicated region
        $region41: #{tpu_custom_call.1} parent=35 // pred_check
          %p226 = pneg %p65
        $region42: #{tpu_custom_call.1} parent=35 // pred_check_branch
          %228 = sbr.rel (%p226) target = $region44
        $region43: #{tpu_custom_call.1} parent=35 // pred_region
          %229 = dma.done [#allocation6], 12288
        $region44: #{tpu_custom_call.1} parent=35 // pred_fallthru
          _
        // Predicated region
        $region45: #{tpu_custom_call.1} parent=35 // pred_check
          %p230 = pneg %p86
        $region46: #{tpu_custom_call.1} parent=35 // pred_check_branch
          %232 = sbr.rel (%p230) target = $region48
        $region47: #{tpu_custom_call.1} parent=35 // pred_region
          %233 = dma.done [#allocation6], 1024
        $region48: #{tpu_custom_call.1} parent=35 // pred_fallthru
          _
        // Predicated region
        $region49: #{tpu_custom_call.1} parent=35 // pred_check
          %p234 = pneg %p107
        $region50: #{tpu_custom_call.1} parent=35 // pred_check_branch
          %236 = sbr.rel (%p234) target = $region52
        $region51: #{tpu_custom_call.1} parent=35 // pred_region
          %237 = dma.done [#allocation9], 128
        $region52: #{tpu_custom_call.1} parent=35 // pred_fallthru
          _
        %s238 = sand.u32 %s31, 1
        %s239 = scalar_lea.sflag [#allocation3], %s238
        %s240 = sand.u32 %s31, 1
        %s241 = smul.addr %s240, 16
        %s242 = scalar_lea.vmem [#allocation2], %s241
        %p243 = pneg %p44
        %p244 = pneg %p41
        %p245 = pneg %p65
        %p246 = pneg %p62
        %p247 = pneg %p86
        %p248 = pneg %p83
        %p249 = pneg %p107
        %p250 = pneg %p104
        %p251 = pneg %p133
        %p252 = pneg %p130
        %s253 = sand.u32 %s120, 1
        %s254 = scalar_lea.sflag [#allocation4], %s253
        %s255 = sand.u32 %s120, 1
        %s256 = smul.addr %s255, 16
        %s257 = scalar_lea.vmem [#allocation10], %s256
        %v259 = vlaneseq
        %v260 = vshrl.u32 %v259, 7
        %v261 = vadd.s32 %v260, 8
        %v262 = vld [vmem:[%s221] sm:$0xff]
        %v263 = vld [vmem:[%s221 + $0x8] sm:$0xff]
        %v264 = vrot.slane %v262, 7
        %v265 = vrot.slane %v263, 7
        %vm266 = vcmp.lt.s32.totalorder %v260, 1
        %v267 = vsel %vm266, %v264, %v265
        %v268 = vsel %vm266, %v265, %v264
        %vm269 = vcmp.ge.s32.totalorder %v260, 1
        %vm270 = vcmp.ge.s32.totalorder %v261, 1
        %v271 = vsel %vm269, %v268, 0.0
        %v272 = vsel %vm270, %v267, 0.0
        %v273 = vpack.c.bf16 %v272, %v271
        %v274 = vpack.c.bf16 %v263, %v262
        %v275 = vld [vmem:[#allocation5] sm:$0xf]
        %v276 = vld [vmem:[#allocation5 + $0x4] sm:$0xf]
        %v277 = vld [vmem:[#allocation5 + $0x8] sm:$0xf]
        %v278 = vld [vmem:[#allocation5 + $0xc] sm:$0xf]
        %v279 = vld [vmem:[#allocation5 + $0x10] sm:$0xf]
        %v280 = vld [vmem:[#allocation5 + $0x14] sm:$0xf]
        %v281 = vld [vmem:[#allocation5 + $0x18] sm:$0xf]
        %v282 = vld [vmem:[#allocation5 + $0x1c] sm:$0xf]
        %v283 = vld [vmem:[#allocation5 + $0x20] sm:$0xf]
        %v284 = vld [vmem:[#allocation5 + $0x24] sm:$0xf]
        %v285 = vld [vmem:[#allocation5 + $0x28] sm:$0xf]
        %v286 = vld [vmem:[#allocation5 + $0x2c] sm:$0xf]
        %v287 = vld [vmem:[#allocation5 + $0x30] sm:$0xf]
        %v288 = vld [vmem:[#allocation5 + $0x34] sm:$0xf]
        %v289 = vld [vmem:[#allocation5 + $0x38] sm:$0xf]
        %v290 = vld [vmem:[#allocation5 + $0x3c] sm:$0xf]
        %v291 = vld [vmem:[#allocation5 + $0x40] sm:$0xf]
        %v292 = vld [vmem:[#allocation5 + $0x44] sm:$0xf]
        %v293 = vld [vmem:[#allocation5 + $0x48] sm:$0xf]
        %v294 = vld [vmem:[#allocation5 + $0x4c] sm:$0xf]
        %v295 = vld [vmem:[#allocation5 + $0x50] sm:$0xf]
        %v296 = vld [vmem:[#allocation5 + $0x54] sm:$0xf]
        %v297 = vld [vmem:[#allocation5 + $0x58] sm:$0xf]
        %v298 = vld [vmem:[#allocation5 + $0x5c] sm:$0xf]
        %v299 = vld [vmem:[#allocation5 + $0x60] sm:$0xf]
        %v300 = vld [vmem:[#allocation5 + $0x64] sm:$0xf]
        %v301 = vld [vmem:[#allocation5 + $0x68] sm:$0xf]
        %v302 = vld [vmem:[#allocation5 + $0x6c] sm:$0xf]
        %v303 = vld [vmem:[#allocation5 + $0x70] sm:$0xf]
        %v304 = vld [vmem:[#allocation5 + $0x74] sm:$0xf]
        %v305 = vld [vmem:[#allocation5 + $0x78] sm:$0xf]
        %v306 = vld [vmem:[#allocation5 + $0x7c] sm:$0xf]
        %v307 = vld [vmem:[#allocation8] sm:$0x1]
        %v308 = vlaneseq
        %v309 = vshrl.u32 %v308, 7
        %v310 = vsub.s32 0, %v309
        %v311 = vrot.slane %v307, %v310
        %v344 = vunpack.c.l.b16 %v275
        %v345 = vunpack.c.l.b16 %v276
        %v346 = vunpack.c.l.b16 %v277
        %v347 = vunpack.c.l.b16 %v278
        %v348 = vunpack.c.l.b16 %v279
        %v349 = vunpack.c.l.b16 %v280
        %v350 = vunpack.c.l.b16 %v281
        %v351 = vunpack.c.l.b16 %v282
        %v352 = vunpack.c.l.b16 %v283
        %v353 = vunpack.c.l.b16 %v284
        %v354 = vunpack.c.l.b16 %v285
        %v355 = vunpack.c.l.b16 %v286
        %v356 = vunpack.c.l.b16 %v287
        %v357 = vunpack.c.l.b16 %v288
        %v358 = vunpack.c.l.b16 %v289
        %v359 = vunpack.c.l.b16 %v290
        %v360 = vunpack.c.l.b16 %v291
        %v361 = vunpack.c.l.b16 %v292
        %v362 = vunpack.c.l.b16 %v293
        %v363 = vunpack.c.l.b16 %v294
        %v364 = vunpack.c.l.b16 %v295
        %v365 = vunpack.c.l.b16 %v296
        %v366 = vunpack.c.l.b16 %v297
        %v367 = vunpack.c.l.b16 %v298
        %v368 = vunpack.c.l.b16 %v299
        %v369 = vunpack.c.l.b16 %v300
        %v370 = vunpack.c.l.b16 %v301
        %v371 = vunpack.c.l.b16 %v302
        %v372 = vunpack.c.l.b16 %v303
        %v373 = vunpack.c.l.b16 %v304
        %v374 = vunpack.c.l.b16 %v305
        %v375 = vunpack.c.l.b16 %v306
        %v376 = vpack.c.b16 %v345, %v344
        %v377 = vpack.c.b16 %v347, %v346
        %v378 = vpack.c.b16 %v349, %v348
        %v379 = vpack.c.b16 %v351, %v350
        %v380 = vpack.c.b16 %v353, %v352
        %v381 = vpack.c.b16 %v355, %v354
        %v382 = vpack.c.b16 %v357, %v356
        %v383 = vpack.c.b16 %v359, %v358
        %v384 = vpack.c.b16 %v361, %v360
        %v385 = vpack.c.b16 %v363, %v362
        %v386 = vpack.c.b16 %v365, %v364
        %v387 = vpack.c.b16 %v367, %v366
        %v388 = vpack.c.b16 %v369, %v368
        %v389 = vpack.c.b16 %v371, %v370
        %v390 = vpack.c.b16 %v373, %v372
        %v391 = vpack.c.b16 %v375, %v374
        %408 = vmatprep.subr.bf16.mxu0 0
        %409 = vmatpush1.bf16.msra.mxu0 %v383
        %410 = vmatprep.subr.bf16.mxu0 0
        %411 = vmatpush1.bf16.msra.mxu0 %v382
        %412 = vmatprep.subr.bf16.mxu0 0
        %413 = vmatpush1.bf16.msra.mxu0 %v381
        %414 = vmatprep.subr.bf16.mxu0 0
        %415 = vmatpush1.bf16.msra.mxu0 %v380
        %416 = vmatprep.subr.bf16.mxu0 0
        %417 = vmatpush1.bf16.msra.mxu0 %v379
        %418 = vmatprep.subr.bf16.mxu0 0
        %419 = vmatpush1.bf16.msra.mxu0 %v378
        %420 = vmatprep.subr.bf16.mxu0 0
        %421 = vmatpush1.bf16.msra.mxu0 %v377
        %422 = vmatprep.subr.bf16.mxu0 0
        %423 = vmatpush1.bf16.msra.mxu0 %v376
        %424 = vmatprep.subr.bf16.mxu0 0
        %425 = vmatpush2.bf16.msra.mxu0 %v391
        %426 = vmatprep.subr.bf16.mxu0 0
        %427 = vmatpush2.bf16.msra.mxu0 %v390
        %428 = vmatprep.subr.bf16.mxu0 0
        %429 = vmatpush2.bf16.msra.mxu0 %v389
        %430 = vmatprep.subr.bf16.mxu0 0
        %431 = vmatpush2.bf16.msra.mxu0 %v388
        %432 = vmatprep.subr.bf16.mxu0 0
        %433 = vmatpush2.bf16.msra.mxu0 %v387
        %434 = vmatprep.subr.bf16.mxu0 0
        %435 = vmatpush2.bf16.msra.mxu0 %v386
        %436 = vmatprep.subr.bf16.mxu0 0
        %437 = vmatpush2.bf16.msra.mxu0 %v385
        %438 = vmatprep.subr.bf16.mxu0 0
        %439 = vmatpush2.bf16.msra.mxu0 %v384
        %440 = vmatprep.mubr.bf16.mxu0 %v274
        %441 = vmatmul.mubr.bf16.gmra.mxu0 %v273
        %v442 = vpop.f32.mrf.mxu0
        %v443 = vadd.f32 %v311, %v442
        %v444 = vpop.f32.mrf.mxu0
        %v445 = vpop.f32.mrf.mxu0
        %v446 = vadd.f32 %v311, %v445
        %v447 = vpop.f32.mrf.mxu0
        %448 = vdwg.mxu0
        %v449 = vmax.f32 %v443, 0.0
        %v450 = vmax.f32 %v446, 0.0
        %v451 = vrot.slane %v449, 7
        %v452 = vrot.slane %v450, 7
        %v453 = vsel %vm266, %v451, %v452
        %v454 = vsel %vm266, %v452, %v451
        %v455 = vsel %vm269, %v454, 0.0
        %v456 = vsel %vm270, %v453, 0.0
        %v457 = vpack.c.bf16 %v456, %v455
        %v458 = vpack.c.bf16 %v450, %v449
        %s459 = scalar_lea.vmem [#allocation5], 128
        %v460 = vld [vmem:[%s459] sm:$0xf]
        %v461 = vld [vmem:[%s459 + $0x4] sm:$0xf]
        %v462 = vld [vmem:[%s459 + $0x8] sm:$0xf]
        %v463 = vld [vmem:[%s459 + $0xc] sm:$0xf]
        %v464 = vld [vmem:[%s459 + $0x10] sm:$0xf]
        %v465 = vld [vmem:[%s459 + $0x14] sm:$0xf]
        %v466 = vld [vmem:[%s459 + $0x18] sm:$0xf]
        %v467 = vld [vmem:[%s459 + $0x1c] sm:$0xf]
        %v468 = vld [vmem:[%s459 + $0x20] sm:$0xf]
        %v469 = vld [vmem:[%s459 + $0x24] sm:$0xf]
        %v470 = vld [vmem:[%s459 + $0x28] sm:$0xf]
        %v471 = vld [vmem:[%s459 + $0x2c] sm:$0xf]
        %v472 = vld [vmem:[%s459 + $0x30] sm:$0xf]
        %v473 = vld [vmem:[%s459 + $0x34] sm:$0xf]
        %v474 = vld [vmem:[%s459 + $0x38] sm:$0xf]
        %v475 = vld [vmem:[%s459 + $0x3c] sm:$0xf]
        %v476 = vld [vmem:[%s459 + $0x40] sm:$0xf]
        %v477 = vld [vmem:[%s459 + $0x44] sm:$0xf]
        %v478 = vld [vmem:[%s459 + $0x48] sm:$0xf]
        %v479 = vld [vmem:[%s459 + $0x4c] sm:$0xf]
        %v480 = vld [vmem:[%s459 + $0x50] sm:$0xf]
        %v481 = vld [vmem:[%s459 + $0x54] sm:$0xf]
        %v482 = vld [vmem:[%s459 + $0x58] sm:$0xf]
        %v483 = vld [vmem:[%s459 + $0x5c] sm:$0xf]
        %v484 = vld [vmem:[%s459 + $0x60] sm:$0xf]
        %v485 = vld [vmem:[%s459 + $0x64] sm:$0xf]
        %v486 = vld [vmem:[%s459 + $0x68] sm:$0xf]
        %v487 = vld [vmem:[%s459 + $0x6c] sm:$0xf]
        %v488 = vld [vmem:[%s459 + $0x70] sm:$0xf]
        %v489 = vld [vmem:[%s459 + $0x74] sm:$0xf]
        %v490 = vld [vmem:[%s459 + $0x78] sm:$0xf]
        %v491 = vld [vmem:[%s459 + $0x7c] sm:$0xf]
        %v492 = vld [vmem:[#allocation8 + $0x1] sm:$0x1]
        %v493 = vlaneseq
        %v494 = vshrl.u32 %v493, 7
        %v495 = vsub.s32 0, %v494
        %v496 = vrot.slane %v492, %v495
        %v529 = vunpack.c.l.b16 %v460
        %v530 = vunpack.c.l.b16 %v461
        %v531 = vunpack.c.l.b16 %v462
        %v532 = vunpack.c.l.b16 %v463
        %v533 = vunpack.c.l.b16 %v464
        %v534 = vunpack.c.l.b16 %v465
        %v535 = vunpack.c.l.b16 %v466
        %v536 = vunpack.c.l.b16 %v467
        %v537 = vunpack.c.l.b16 %v468
        %v538 = vunpack.c.l.b16 %v469
        %v539 = vunpack.c.l.b16 %v470
        %v540 = vunpack.c.l.b16 %v471
        %v541 = vunpack.c.l.b16 %v472
        %v542 = vunpack.c.l.b16 %v473
        %v543 = vunpack.c.l.b16 %v474
        %v544 = vunpack.c.l.b16 %v475
        %v545 = vunpack.c.l.b16 %v476
        %v546 = vunpack.c.l.b16 %v477
        %v547 = vunpack.c.l.b16 %v478
        %v548 = vunpack.c.l.b16 %v479
        %v549 = vunpack.c.l.b16 %v480
        %v550 = vunpack.c.l.b16 %v481
        %v551 = vunpack.c.l.b16 %v482
        %v552 = vunpack.c.l.b16 %v483
        %v553 = vunpack.c.l.b16 %v484
        %v554 = vunpack.c.l.b16 %v485
        %v555 = vunpack.c.l.b16 %v486
        %v556 = vunpack.c.l.b16 %v487
        %v557 = vunpack.c.l.b16 %v488
        %v558 = vunpack.c.l.b16 %v489
        %v559 = vunpack.c.l.b16 %v490
        %v560 = vunpack.c.l.b16 %v491
        %v561 = vpack.c.b16 %v530, %v529
        %v562 = vpack.c.b16 %v532, %v531
        %v563 = vpack.c.b16 %v534, %v533
        %v564 = vpack.c.b16 %v536, %v535
        %v565 = vpack.c.b16 %v538, %v537
        %v566 = vpack.c.b16 %v540, %v539
        %v567 = vpack.c.b16 %v542, %v541
        %v568 = vpack.c.b16 %v544, %v543
        %v569 = vpack.c.b16 %v546, %v545
        %v570 = vpack.c.b16 %v548, %v547
        %v571 = vpack.c.b16 %v550, %v549
        %v572 = vpack.c.b16 %v552, %v551
        %v573 = vpack.c.b16 %v554, %v553
        %v574 = vpack.c.b16 %v556, %v555
        %v575 = vpack.c.b16 %v558, %v557
        %v576 = vpack.c.b16 %v560, %v559
        %593 = vmatprep.subr.bf16.mxu0 0
        %594 = vmatpush1.bf16.msra.mxu0 %v568
        %595 = vmatprep.subr.bf16.mxu0 0
        %596 = vmatpush1.bf16.msra.mxu0 %v567
        %597 = vmatprep.subr.bf16.mxu0 0
        %598 = vmatpush1.bf16.msra.mxu0 %v566
        %599 = vmatprep.subr.bf16.mxu0 0
        %600 = vmatpush1.bf16.msra.mxu0 %v565
        %601 = vmatprep.subr.bf16.mxu0 0
        %602 = vmatpush1.bf16.msra.mxu0 %v564
        %603 = vmatprep.subr.bf16.mxu0 0
        %604 = vmatpush1.bf16.msra.mxu0 %v563
        %605 = vmatprep.subr.bf16.mxu0 0
        %606 = vmatpush1.bf16.msra.mxu0 %v562
        %607 = vmatprep.subr.bf16.mxu0 0
        %608 = vmatpush1.bf16.msra.mxu0 %v561
        %609 = vmatprep.subr.bf16.mxu0 0
        %610 = vmatpush2.bf16.msra.mxu0 %v576
        %611 = vmatprep.subr.bf16.mxu0 0
        %612 = vmatpush2.bf16.msra.mxu0 %v575
        %613 = vmatprep.subr.bf16.mxu0 0
        %614 = vmatpush2.bf16.msra.mxu0 %v574
        %615 = vmatprep.subr.bf16.mxu0 0
        %616 = vmatpush2.bf16.msra.mxu0 %v573
        %617 = vmatprep.subr.bf16.mxu0 0
        %618 = vmatpush2.bf16.msra.mxu0 %v572
        %619 = vmatprep.subr.bf16.mxu0 0
        %620 = vmatpush2.bf16.msra.mxu0 %v571
        %621 = vmatprep.subr.bf16.mxu0 0
        %622 = vmatpush2.bf16.msra.mxu0 %v570
        %623 = vmatprep.subr.bf16.mxu0 0
        %624 = vmatpush2.bf16.msra.mxu0 %v569
        %625 = vmatprep.mubr.bf16.mxu0 %v458
        %626 = vmatmul.mubr.bf16.gmra.mxu0 %v457
        %v627 = vpop.f32.mrf.mxu0
        %v628 = vadd.f32 %v496, %v627
        %v629 = vpop.f32.mrf.mxu0
        %v630 = vpop.f32.mrf.mxu0
        %v631 = vadd.f32 %v496, %v630
        %v632 = vpop.f32.mrf.mxu0
        %633 = vdwg.mxu0
        %v634 = vmax.f32 %v628, 0.0
        %v635 = vmax.f32 %v631, 0.0
        %v636 = vld [vmem:[#allocation7] sm:$0xf]
        %v637 = vld [vmem:[#allocation7 + $0x4] sm:$0xf]
        %v638 = vld [vmem:[#allocation7 + $0x8] sm:$0xf]
        %v639 = vld [vmem:[#allocation7 + $0xc] sm:$0xf]
        %v640 = vld [vmem:[#allocation7 + $0x10] sm:$0xf]
        %v641 = vld [vmem:[#allocation7 + $0x14] sm:$0xf]
        %v642 = vld [vmem:[#allocation7 + $0x18] sm:$0xf]
        %v643 = vld [vmem:[#allocation7 + $0x1c] sm:$0xf]
        %v644 = vld [vmem:[#allocation7 + $0x20] sm:$0xf]
        %v645 = vld [vmem:[#allocation7 + $0x24] sm:$0xf]
        %v646 = vld [vmem:[#allocation7 + $0x28] sm:$0xf]
        %v647 = vld [vmem:[#allocation7 + $0x2c] sm:$0xf]
        %v648 = vld [vmem:[#allocation7 + $0x30] sm:$0xf]
        %v649 = vld [vmem:[#allocation7 + $0x34] sm:$0xf]
        %v650 = vld [vmem:[#allocation7 + $0x38] sm:$0xf]
        %v651 = vld [vmem:[#allocation7 + $0x3c] sm:$0xf]
        %v652 = vld [vmem:[#allocation8 + $0x2] sm:$0x1]
        %v653 = vlaneseq
        %v654 = vshrl.u32 %v653, 7
        %v655 = vsub.s32 0, %v654
        %v656 = vrot.slane %v652, %v655
        %v673 = vunpack.c.l.b16 %v636
        %v674 = vunpack.c.l.b16 %v637
        %v675 = vunpack.c.l.b16 %v638
        %v676 = vunpack.c.l.b16 %v639
        %v677 = vunpack.c.l.b16 %v640
        %v678 = vunpack.c.l.b16 %v641
        %v679 = vunpack.c.l.b16 %v642
        %v680 = vunpack.c.l.b16 %v643
        %v681 = vunpack.c.l.b16 %v644
        %v682 = vunpack.c.l.b16 %v645
        %v683 = vunpack.c.l.b16 %v646
        %v684 = vunpack.c.l.b16 %v647
        %v685 = vunpack.c.l.b16 %v648
        %v686 = vunpack.c.l.b16 %v649
        %v687 = vunpack.c.l.b16 %v650
        %v688 = vunpack.c.l.b16 %v651
        %v689 = vpack.c.b16 %v674, %v673
        %v690 = vpack.c.b16 %v676, %v675
        %v691 = vpack.c.b16 %v678, %v677
        %v692 = vpack.c.b16 %v680, %v679
        %v693 = vpack.c.b16 %v682, %v681
        %v694 = vpack.c.b16 %v684, %v683
        %v695 = vpack.c.b16 %v686, %v685
        %v696 = vpack.c.b16 %v688, %v687
        %705 = vmatprep.subr.bf16.mxu0 0
        %706 = vmatpush1.bf16.msra.mxu0 %v696
        %707 = vmatprep.subr.bf16.mxu0 0
        %708 = vmatpush1.bf16.msra.mxu0 %v695
        %709 = vmatprep.subr.bf16.mxu0 0
        %710 = vmatpush1.bf16.msra.mxu0 %v694
        %711 = vmatprep.subr.bf16.mxu0 0
        %712 = vmatpush1.bf16.msra.mxu0 %v693
        %713 = vmatprep.subr.bf16.mxu0 0
        %714 = vmatpush1.bf16.msra.mxu0 %v692
        %715 = vmatprep.subr.bf16.mxu0 0
        %716 = vmatpush1.bf16.msra.mxu0 %v691
        %717 = vmatprep.subr.bf16.mxu0 0
        %718 = vmatpush1.bf16.msra.mxu0 %v690
        %719 = vmatprep.subr.bf16.mxu0 0
        %720 = vmatpush1.bf16.msra.mxu0 %v689
        %721 = vmatprep.subr.bf16.mxu0 0
        %722 = vmatpush2.bf16.msra.mxu0 0
        %723 = vmatprep.subr.bf16.mxu0 0
        %724 = vmatpush2.bf16.msra.mxu0 0
        %725 = vmatprep.subr.bf16.mxu0 0
        %726 = vmatpush2.bf16.msra.mxu0 0
        %727 = vmatprep.subr.bf16.mxu0 0
        %728 = vmatpush2.bf16.msra.mxu0 0
        %729 = vmatprep.subr.bf16.mxu0 0
        %730 = vmatpush2.bf16.msra.mxu0 0
        %731 = vmatprep.subr.bf16.mxu0 0
        %732 = vmatpush2.bf16.msra.mxu0 0
        %733 = vmatprep.subr.bf16.mxu0 0
        %734 = vmatpush2.bf16.msra.mxu0 0
        %735 = vmatprep.subr.bf16.mxu0 0
        %736 = vmatpush2.bf16.msra.mxu0 0
        %737 = vmatprep.mubr.bf16.mxu0 0
        %738 = vmatmul.mubr.bf16.gmra.mxu0 %v274
        %v739 = vpop.f32.mrf.mxu0
        %v740 = vadd.f32 %v656, %v739
        %v741 = vpop.f32.mrf.mxu0
        %v742 = vpop.f32.mrf.mxu0
        %v743 = vadd.f32 %v656, %v742
        %v744 = vpop.f32.mrf.mxu0
        %745 = vdwg.mxu0
        %v746 = vadd.f32 %v634, %v740
        %v747 = vadd.f32 %v635, %v743
        %v748 = vmax.f32 %v746, 0.0
        %v749 = vmax.f32 %v747, 0.0
        %v750 = vrot.slane %v748, 6
        %v751 = vrot.slane %v749, 6
        %vm752 = vcmp.lt.s32.totalorder %v260, 2
        %v753 = vsel %vm752, %v750, %v751
        %v754 = vsel %vm752, %v751, %v750
        %vm755 = vcmp.ge.s32.totalorder %v260, 2
        %vm756 = vcmp.ge.s32.totalorder %v261, 2
        %v757 = vsel %vm755, %v754, 0.0
        %v758 = vsel %vm756, %v753, 0.0
        %v759 = vpack.c.bf16 %v758, %v757
        %v760 = vpack.c.bf16 %v749, %v748
        %s761 = scalar_lea.vmem [#allocation5], 256
        %v762 = vld [vmem:[%s761] sm:$0xf]
        %v763 = vld [vmem:[%s761 + $0x4] sm:$0xf]
        %v764 = vld [vmem:[%s761 + $0x8] sm:$0xf]
        %v765 = vld [vmem:[%s761 + $0xc] sm:$0xf]
        %v766 = vld [vmem:[%s761 + $0x10] sm:$0xf]
        %v767 = vld [vmem:[%s761 + $0x14] sm:$0xf]
        %v768 = vld [vmem:[%s761 + $0x18] sm:$0xf]
        %v769 = vld [vmem:[%s761 + $0x1c] sm:$0xf]
        %v770 = vld [vmem:[%s761 + $0x20] sm:$0xf]
        %v771 = vld [vmem:[%s761 + $0x24] sm:$0xf]
        %v772 = vld [vmem:[%s761 + $0x28] sm:$0xf]
        %v773 = vld [vmem:[%s761 + $0x2c] sm:$0xf]
        %v774 = vld [vmem:[%s761 + $0x30] sm:$0xf]
        %v775 = vld [vmem:[%s761 + $0x34] sm:$0xf]
        %v776 = vld [vmem:[%s761 + $0x38] sm:$0xf]
        %v777 = vld [vmem:[%s761 + $0x3c] sm:$0xf]
        %v778 = vld [vmem:[%s761 + $0x40] sm:$0xf]
        %v779 = vld [vmem:[%s761 + $0x44] sm:$0xf]
        %v780 = vld [vmem:[%s761 + $0x48] sm:$0xf]
        %v781 = vld [vmem:[%s761 + $0x4c] sm:$0xf]
        %v782 = vld [vmem:[%s761 + $0x50] sm:$0xf]
        %v783 = vld [vmem:[%s761 + $0x54] sm:$0xf]
        %v784 = vld [vmem:[%s761 + $0x58] sm:$0xf]
        %v785 = vld [vmem:[%s761 + $0x5c] sm:$0xf]
        %v786 = vld [vmem:[%s761 + $0x60] sm:$0xf]
        %v787 = vld [vmem:[%s761 + $0x64] sm:$0xf]
        %v788 = vld [vmem:[%s761 + $0x68] sm:$0xf]
        %v789 = vld [vmem:[%s761 + $0x6c] sm:$0xf]
        %v790 = vld [vmem:[%s761 + $0x70] sm:$0xf]
        %v791 = vld [vmem:[%s761 + $0x74] sm:$0xf]
        %v792 = vld [vmem:[%s761 + $0x78] sm:$0xf]
        %v793 = vld [vmem:[%s761 + $0x7c] sm:$0xf]
        %v794 = vld [vmem:[#allocation8 + $0x3] sm:$0x1]
        %v795 = vlaneseq
        %v796 = vshrl.u32 %v795, 7
        %v797 = vsub.s32 0, %v796
        %v798 = vrot.slane %v794, %v797
        %v831 = vunpack.c.l.b16 %v762
        %v832 = vunpack.c.l.b16 %v763
        %v833 = vunpack.c.l.b16 %v764
        %v834 = vunpack.c.l.b16 %v765
        %v835 = vunpack.c.l.b16 %v766
        %v836 = vunpack.c.l.b16 %v767
        %v837 = vunpack.c.l.b16 %v768
        %v838 = vunpack.c.l.b16 %v769
        %v839 = vunpack.c.l.b16 %v770
        %v840 = vunpack.c.l.b16 %v771
        %v841 = vunpack.c.l.b16 %v772
        %v842 = vunpack.c.l.b16 %v773
        %v843 = vunpack.c.l.b16 %v774
        %v844 = vunpack.c.l.b16 %v775
        %v845 = vunpack.c.l.b16 %v776
        %v846 = vunpack.c.l.b16 %v777
        %v847 = vunpack.c.l.b16 %v778
        %v848 = vunpack.c.l.b16 %v779
        %v849 = vunpack.c.l.b16 %v780
        %v850 = vunpack.c.l.b16 %v781
        %v851 = vunpack.c.l.b16 %v782
        %v852 = vunpack.c.l.b16 %v783
        %v853 = vunpack.c.l.b16 %v784
        %v854 = vunpack.c.l.b16 %v785
        %v855 = vunpack.c.l.b16 %v786
        %v856 = vunpack.c.l.b16 %v787
        %v857 = vunpack.c.l.b16 %v788
        %v858 = vunpack.c.l.b16 %v789
        %v859 = vunpack.c.l.b16 %v790
        %v860 = vunpack.c.l.b16 %v791
        %v861 = vunpack.c.l.b16 %v792
        %v862 = vunpack.c.l.b16 %v793
        %v863 = vpack.c.b16 %v832, %v831
        %v864 = vpack.c.b16 %v834, %v833
        %v865 = vpack.c.b16 %v836, %v835
        %v866 = vpack.c.b16 %v838, %v837
        %v867 = vpack.c.b16 %v840, %v839
        %v868 = vpack.c.b16 %v842, %v841
        %v869 = vpack.c.b16 %v844, %v843
        %v870 = vpack.c.b16 %v846, %v845
        %v871 = vpack.c.b16 %v848, %v847
        %v872 = vpack.c.b16 %v850, %v849
        %v873 = vpack.c.b16 %v852, %v851
        %v874 = vpack.c.b16 %v854, %v853
        %v875 = vpack.c.b16 %v856, %v855
        %v876 = vpack.c.b16 %v858, %v857
        %v877 = vpack.c.b16 %v860, %v859
        %v878 = vpack.c.b16 %v862, %v861
        %895 = vmatprep.subr.bf16.mxu0 0
        %896 = vmatpush1.bf16.msra.mxu0 %v870
        %897 = vmatprep.subr.bf16.mxu0 0
        %898 = vmatpush1.bf16.msra.mxu0 %v869
        %899 = vmatprep.subr.bf16.mxu0 0
        %900 = vmatpush1.bf16.msra.mxu0 %v868
        %901 = vmatprep.subr.bf16.mxu0 0
        %902 = vmatpush1.bf16.msra.mxu0 %v867
        %903 = vmatprep.subr.bf16.mxu0 0
        %904 = vmatpush1.bf16.msra.mxu0 %v866
        %905 = vmatprep.subr.bf16.mxu0 0
        %906 = vmatpush1.bf16.msra.mxu0 %v865
        %907 = vmatprep.subr.bf16.mxu0 0
        %908 = vmatpush1.bf16.msra.mxu0 %v864
        %909 = vmatprep.subr.bf16.mxu0 0
        %910 = vmatpush1.bf16.msra.mxu0 %v863
        %911 = vmatprep.subr.bf16.mxu0 0
        %912 = vmatpush2.bf16.msra.mxu0 %v878
        %913 = vmatprep.subr.bf16.mxu0 0
        %914 = vmatpush2.bf16.msra.mxu0 %v877
        %915 = vmatprep.subr.bf16.mxu0 0
        %916 = vmatpush2.bf16.msra.mxu0 %v876
        %917 = vmatprep.subr.bf16.mxu0 0
        %918 = vmatpush2.bf16.msra.mxu0 %v875
        %919 = vmatprep.subr.bf16.mxu0 0
        %920 = vmatpush2.bf16.msra.mxu0 %v874
        %921 = vmatprep.subr.bf16.mxu0 0
        %922 = vmatpush2.bf16.msra.mxu0 %v873
        %923 = vmatprep.subr.bf16.mxu0 0
        %924 = vmatpush2.bf16.msra.mxu0 %v872
        %925 = vmatprep.subr.bf16.mxu0 0
        %926 = vmatpush2.bf16.msra.mxu0 %v871
        %927 = vmatprep.mubr.bf16.mxu0 %v760
        %928 = vmatmul.mubr.bf16.gmra.mxu0 %v759
        %v929 = vpop.f32.mrf.mxu0
        %v930 = vadd.f32 %v798, %v929
        %v931 = vpop.f32.mrf.mxu0
        %v932 = vpop.f32.mrf.mxu0
        %v933 = vadd.f32 %v798, %v932
        %v934 = vpop.f32.mrf.mxu0
        %935 = vdwg.mxu0
        %v936 = vmax.f32 %v930, 0.0
        %v937 = vmax.f32 %v933, 0.0
        %v938 = vrot.slane %v936, 6
        %v939 = vrot.slane %v937, 6
        %v940 = vsel %vm752, %v938, %v939
        %v941 = vsel %vm752, %v939, %v938
        %v942 = vsel %vm755, %v941, 0.0
        %v943 = vsel %vm756, %v940, 0.0
        %v944 = vpack.c.bf16 %v943, %v942
        %v945 = vpack.c.bf16 %v937, %v936
        %s946 = scalar_lea.vmem [#allocation5], 384
        %v947 = vld [vmem:[%s946] sm:$0xf]
        %v948 = vld [vmem:[%s946 + $0x4] sm:$0xf]
        %v949 = vld [vmem:[%s946 + $0x8] sm:$0xf]
        %v950 = vld [vmem:[%s946 + $0xc] sm:$0xf]
        %v951 = vld [vmem:[%s946 + $0x10] sm:$0xf]
        %v952 = vld [vmem:[%s946 + $0x14] sm:$0xf]
        %v953 = vld [vmem:[%s946 + $0x18] sm:$0xf]
        %v954 = vld [vmem:[%s946 + $0x1c] sm:$0xf]
        %v955 = vld [vmem:[%s946 + $0x20] sm:$0xf]
        %v956 = vld [vmem:[%s946 + $0x24] sm:$0xf]
        %v957 = vld [vmem:[%s946 + $0x28] sm:$0xf]
        %v958 = vld [vmem:[%s946 + $0x2c] sm:$0xf]
        %v959 = vld [vmem:[%s946 + $0x30] sm:$0xf]
        %v960 = vld [vmem:[%s946 + $0x34] sm:$0xf]
        %v961 = vld [vmem:[%s946 + $0x38] sm:$0xf]
        %v962 = vld [vmem:[%s946 + $0x3c] sm:$0xf]
        %v963 = vld [vmem:[%s946 + $0x40] sm:$0xf]
        %v964 = vld [vmem:[%s946 + $0x44] sm:$0xf]
        %v965 = vld [vmem:[%s946 + $0x48] sm:$0xf]
        %v966 = vld [vmem:[%s946 + $0x4c] sm:$0xf]
        %v967 = vld [vmem:[%s946 + $0x50] sm:$0xf]
        %v968 = vld [vmem:[%s946 + $0x54] sm:$0xf]
        %v969 = vld [vmem:[%s946 + $0x58] sm:$0xf]
        %v970 = vld [vmem:[%s946 + $0x5c] sm:$0xf]
        %v971 = vld [vmem:[%s946 + $0x60] sm:$0xf]
        %v972 = vld [vmem:[%s946 + $0x64] sm:$0xf]
        %v973 = vld [vmem:[%s946 + $0x68] sm:$0xf]
        %v974 = vld [vmem:[%s946 + $0x6c] sm:$0xf]
        %v975 = vld [vmem:[%s946 + $0x70] sm:$0xf]
        %v976 = vld [vmem:[%s946 + $0x74] sm:$0xf]
        %v977 = vld [vmem:[%s946 + $0x78] sm:$0xf]
        %v978 = vld [vmem:[%s946 + $0x7c] sm:$0xf]
        %v979 = vld [vmem:[#allocation8 + $0x4] sm:$0x1]
        %v980 = vlaneseq
        %v981 = vshrl.u32 %v980, 7
        %v982 = vsub.s32 0, %v981
        %v983 = vrot.slane %v979, %v982
        %v1016 = vunpack.c.l.b16 %v947
        %v1017 = vunpack.c.l.b16 %v948
        %v1018 = vunpack.c.l.b16 %v949
        %v1019 = vunpack.c.l.b16 %v950
        %v1020 = vunpack.c.l.b16 %v951
        %v1021 = vunpack.c.l.b16 %v952
        %v1022 = vunpack.c.l.b16 %v953
        %v1023 = vunpack.c.l.b16 %v954
        %v1024 = vunpack.c.l.b16 %v955
        %v1025 = vunpack.c.l.b16 %v956
        %v1026 = vunpack.c.l.b16 %v957
        %v1027 = vunpack.c.l.b16 %v958
        %v1028 = vunpack.c.l.b16 %v959
        %v1029 = vunpack.c.l.b16 %v960
        %v1030 = vunpack.c.l.b16 %v961
        %v1031 = vunpack.c.l.b16 %v962
        %v1032 = vunpack.c.l.b16 %v963
        %v1033 = vunpack.c.l.b16 %v964
        %v1034 = vunpack.c.l.b16 %v965
        %v1035 = vunpack.c.l.b16 %v966
        %v1036 = vunpack.c.l.b16 %v967
        %v1037 = vunpack.c.l.b16 %v968
        %v1038 = vunpack.c.l.b16 %v969
        %v1039 = vunpack.c.l.b16 %v970
        %v1040 = vunpack.c.l.b16 %v971
        %v1041 = vunpack.c.l.b16 %v972
        %v1042 = vunpack.c.l.b16 %v973
        %v1043 = vunpack.c.l.b16 %v974
        %v1044 = vunpack.c.l.b16 %v975
        %v1045 = vunpack.c.l.b16 %v976
        %v1046 = vunpack.c.l.b16 %v977
        %v1047 = vunpack.c.l.b16 %v978
        %v1048 = vpack.c.b16 %v1017, %v1016
        %v1049 = vpack.c.b16 %v1019, %v1018
        %v1050 = vpack.c.b16 %v1021, %v1020
        %v1051 = vpack.c.b16 %v1023, %v1022
        %v1052 = vpack.c.b16 %v1025, %v1024
        %v1053 = vpack.c.b16 %v1027, %v1026
        %v1054 = vpack.c.b16 %v1029, %v1028
        %v1055 = vpack.c.b16 %v1031, %v1030
        %v1056 = vpack.c.b16 %v1033, %v1032
        %v1057 = vpack.c.b16 %v1035, %v1034
        %v1058 = vpack.c.b16 %v1037, %v1036
        %v1059 = vpack.c.b16 %v1039, %v1038
        %v1060 = vpack.c.b16 %v1041, %v1040
        %v1061 = vpack.c.b16 %v1043, %v1042
        %v1062 = vpack.c.b16 %v1045, %v1044
        %v1063 = vpack.c.b16 %v1047, %v1046
        %1080 = vmatprep.subr.bf16.mxu0 0
        %1081 = vmatpush1.bf16.msra.mxu0 %v1055
        %1082 = vmatprep.subr.bf16.mxu0 0
        %1083 = vmatpush1.bf16.msra.mxu0 %v1054
        %1084 = vmatprep.subr.bf16.mxu0 0
        %1085 = vmatpush1.bf16.msra.mxu0 %v1053
        %1086 = vmatprep.subr.bf16.mxu0 0
        %1087 = vmatpush1.bf16.msra.mxu0 %v1052
        %1088 = vmatprep.subr.bf16.mxu0 0
        %1089 = vmatpush1.bf16.msra.mxu0 %v1051
        %1090 = vmatprep.subr.bf16.mxu0 0
        %1091 = vmatpush1.bf16.msra.mxu0 %v1050
        %1092 = vmatprep.subr.bf16.mxu0 0
        %1093 = vmatpush1.bf16.msra.mxu0 %v1049
        %1094 = vmatprep.subr.bf16.mxu0 0
        %1095 = vmatpush1.bf16.msra.mxu0 %v1048
        %1096 = vmatprep.subr.bf16.mxu0 0
        %1097 = vmatpush2.bf16.msra.mxu0 %v1063
        %1098 = vmatprep.subr.bf16.mxu0 0
        %1099 = vmatpush2.bf16.msra.mxu0 %v1062
        %1100 = vmatprep.subr.bf16.mxu0 0
        %1101 = vmatpush2.bf16.msra.mxu0 %v1061
        %1102 = vmatprep.subr.bf16.mxu0 0
        %1103 = vmatpush2.bf16.msra.mxu0 %v1060
        %1104 = vmatprep.subr.bf16.mxu0 0
        %1105 = vmatpush2.bf16.msra.mxu0 %v1059
        %1106 = vmatprep.subr.bf16.mxu0 0
        %1107 = vmatpush2.bf16.msra.mxu0 %v1058
        %1108 = vmatprep.subr.bf16.mxu0 0
        %1109 = vmatpush2.bf16.msra.mxu0 %v1057
        %1110 = vmatprep.subr.bf16.mxu0 0
        %1111 = vmatpush2.bf16.msra.mxu0 %v1056
        %1112 = vmatprep.mubr.bf16.mxu0 %v945
        %1113 = vmatmul.mubr.bf16.gmra.mxu0 %v944
        %v1114 = vpop.f32.mrf.mxu0
        %v1115 = vadd.f32 %v983, %v1114
        %v1116 = vpop.f32.mrf.mxu0
        %v1117 = vpop.f32.mrf.mxu0
        %v1118 = vadd.f32 %v983, %v1117
        %v1119 = vpop.f32.mrf.mxu0
        %1120 = vdwg.mxu0
        %v1121 = vmax.f32 %v1115, 0.0
        %v1122 = vmax.f32 %v1118, 0.0
        %v1123 = vadd.f32 %v1121, %v748
        %v1124 = vadd.f32 %v1122, %v749
        %v1125 = vmax.f32 %v1123, 0.0
        %v1126 = vmax.f32 %v1124, 0.0
        %v1127 = vrot.slane %v1125, 4
        %v1128 = vrot.slane %v1126, 4
        %vm1129 = vcmp.lt.s32.totalorder %v260, 4
        %v1130 = vsel %vm1129, %v1127, %v1128
        %v1131 = vsel %vm1129, %v1128, %v1127
        %vm1132 = vcmp.ge.s32.totalorder %v260, 4
        %vm1133 = vcmp.ge.s32.totalorder %v261, 4
        %v1134 = vsel %vm1132, %v1131, 0.0
        %v1135 = vsel %vm1133, %v1130, 0.0
        %v1136 = vpack.c.bf16 %v1135, %v1134
        %v1137 = vpack.c.bf16 %v1126, %v1125
        %s1138 = scalar_lea.vmem [#allocation5], 512
        %v1139 = vld [vmem:[%s1138] sm:$0xf]
        %v1140 = vld [vmem:[%s1138 + $0x4] sm:$0xf]
        %v1141 = vld [vmem:[%s1138 + $0x8] sm:$0xf]
        %v1142 = vld [vmem:[%s1138 + $0xc] sm:$0xf]
        %v1143 = vld [vmem:[%s1138 + $0x10] sm:$0xf]
        %v1144 = vld [vmem:[%s1138 + $0x14] sm:$0xf]
        %v1145 = vld [vmem:[%s1138 + $0x18] sm:$0xf]
        %v1146 = vld [vmem:[%s1138 + $0x1c] sm:$0xf]
        %v1147 = vld [vmem:[%s1138 + $0x20] sm:$0xf]
        %v1148 = vld [vmem:[%s1138 + $0x24] sm:$0xf]
        %v1149 = vld [vmem:[%s1138 + $0x28] sm:$0xf]
        %v1150 = vld [vmem:[%s1138 + $0x2c] sm:$0xf]
        %v1151 = vld [vmem:[%s1138 + $0x30] sm:$0xf]
        %v1152 = vld [vmem:[%s1138 + $0x34] sm:$0xf]
        %v1153 = vld [vmem:[%s1138 + $0x38] sm:$0xf]
        %v1154 = vld [vmem:[%s1138 + $0x3c] sm:$0xf]
        %v1155 = vld [vmem:[%s1138 + $0x40] sm:$0xf]
        %v1156 = vld [vmem:[%s1138 + $0x44] sm:$0xf]
        %v1157 = vld [vmem:[%s1138 + $0x48] sm:$0xf]
        %v1158 = vld [vmem:[%s1138 + $0x4c] sm:$0xf]
        %v1159 = vld [vmem:[%s1138 + $0x50] sm:$0xf]
        %v1160 = vld [vmem:[%s1138 + $0x54] sm:$0xf]
        %v1161 = vld [vmem:[%s1138 + $0x58] sm:$0xf]
        %v1162 = vld [vmem:[%s1138 + $0x5c] sm:$0xf]
        %v1163 = vld [vmem:[%s1138 + $0x60] sm:$0xf]
        %v1164 = vld [vmem:[%s1138 + $0x64] sm:$0xf]
        %v1165 = vld [vmem:[%s1138 + $0x68] sm:$0xf]
        %v1166 = vld [vmem:[%s1138 + $0x6c] sm:$0xf]
        %v1167 = vld [vmem:[%s1138 + $0x70] sm:$0xf]
        %v1168 = vld [vmem:[%s1138 + $0x74] sm:$0xf]
        %v1169 = vld [vmem:[%s1138 + $0x78] sm:$0xf]
        %v1170 = vld [vmem:[%s1138 + $0x7c] sm:$0xf]
        %v1171 = vld [vmem:[#allocation8 + $0x5] sm:$0x1]
        %v1172 = vlaneseq
        %v1173 = vshrl.u32 %v1172, 7
        %v1174 = vsub.s32 0, %v1173
        %v1175 = vrot.slane %v1171, %v1174
        %v1208 = vunpack.c.l.b16 %v1139
        %v1209 = vunpack.c.l.b16 %v1140
        %v1210 = vunpack.c.l.b16 %v1141
        %v1211 = vunpack.c.l.b16 %v1142
        %v1212 = vunpack.c.l.b16 %v1143
        %v1213 = vunpack.c.l.b16 %v1144
        %v1214 = vunpack.c.l.b16 %v1145
        %v1215 = vunpack.c.l.b16 %v1146
        %v1216 = vunpack.c.l.b16 %v1147
        %v1217 = vunpack.c.l.b16 %v1148
        %v1218 = vunpack.c.l.b16 %v1149
        %v1219 = vunpack.c.l.b16 %v1150
        %v1220 = vunpack.c.l.b16 %v1151
        %v1221 = vunpack.c.l.b16 %v1152
        %v1222 = vunpack.c.l.b16 %v1153
        %v1223 = vunpack.c.l.b16 %v1154
        %v1224 = vunpack.c.l.b16 %v1155
        %v1225 = vunpack.c.l.b16 %v1156
        %v1226 = vunpack.c.l.b16 %v1157
        %v1227 = vunpack.c.l.b16 %v1158
        %v1228 = vunpack.c.l.b16 %v1159
        %v1229 = vunpack.c.l.b16 %v1160
        %v1230 = vunpack.c.l.b16 %v1161
        %v1231 = vunpack.c.l.b16 %v1162
        %v1232 = vunpack.c.l.b16 %v1163
        %v1233 = vunpack.c.l.b16 %v1164
        %v1234 = vunpack.c.l.b16 %v1165
        %v1235 = vunpack.c.l.b16 %v1166
        %v1236 = vunpack.c.l.b16 %v1167
        %v1237 = vunpack.c.l.b16 %v1168
        %v1238 = vunpack.c.l.b16 %v1169
        %v1239 = vunpack.c.l.b16 %v1170
        %v1240 = vpack.c.b16 %v1209, %v1208
        %v1241 = vpack.c.b16 %v1211, %v1210
        %v1242 = vpack.c.b16 %v1213, %v1212
        %v1243 = vpack.c.b16 %v1215, %v1214
        %v1244 = vpack.c.b16 %v1217, %v1216
        %v1245 = vpack.c.b16 %v1219, %v1218
        %v1246 = vpack.c.b16 %v1221, %v1220
        %v1247 = vpack.c.b16 %v1223, %v1222
        %v1248 = vpack.c.b16 %v1225, %v1224
        %v1249 = vpack.c.b16 %v1227, %v1226
        %v1250 = vpack.c.b16 %v1229, %v1228
        %v1251 = vpack.c.b16 %v1231, %v1230
        %v1252 = vpack.c.b16 %v1233, %v1232
        %v1253 = vpack.c.b16 %v1235, %v1234
        %v1254 = vpack.c.b16 %v1237, %v1236
        %v1255 = vpack.c.b16 %v1239, %v1238
        %1272 = vmatprep.subr.bf16.mxu0 0
        %1273 = vmatpush1.bf16.msra.mxu0 %v1247
        %1274 = vmatprep.subr.bf16.mxu0 0
        %1275 = vmatpush1.bf16.msra.mxu0 %v1246
        %1276 = vmatprep.subr.bf16.mxu0 0
        %1277 = vmatpush1.bf16.msra.mxu0 %v1245
        %1278 = vmatprep.subr.bf16.mxu0 0
        %1279 = vmatpush1.bf16.msra.mxu0 %v1244
        %1280 = vmatprep.subr.bf16.mxu0 0
        %1281 = vmatpush1.bf16.msra.mxu0 %v1243
        %1282 = vmatprep.subr.bf16.mxu0 0
        %1283 = vmatpush1.bf16.msra.mxu0 %v1242
        %1284 = vmatprep.subr.bf16.mxu0 0
        %1285 = vmatpush1.bf16.msra.mxu0 %v1241
        %1286 = vmatprep.subr.bf16.mxu0 0
        %1287 = vmatpush1.bf16.msra.mxu0 %v1240
        %1288 = vmatprep.subr.bf16.mxu0 0
        %1289 = vmatpush2.bf16.msra.mxu0 %v1255
        %1290 = vmatprep.subr.bf16.mxu0 0
        %1291 = vmatpush2.bf16.msra.mxu0 %v1254
        %1292 = vmatprep.subr.bf16.mxu0 0
        %1293 = vmatpush2.bf16.msra.mxu0 %v1253
        %1294 = vmatprep.subr.bf16.mxu0 0
        %1295 = vmatpush2.bf16.msra.mxu0 %v1252
        %1296 = vmatprep.subr.bf16.mxu0 0
        %1297 = vmatpush2.bf16.msra.mxu0 %v1251
        %1298 = vmatprep.subr.bf16.mxu0 0
        %1299 = vmatpush2.bf16.msra.mxu0 %v1250
        %1300 = vmatprep.subr.bf16.mxu0 0
        %1301 = vmatpush2.bf16.msra.mxu0 %v1249
        %1302 = vmatprep.subr.bf16.mxu0 0
        %1303 = vmatpush2.bf16.msra.mxu0 %v1248
        %1304 = vmatprep.mubr.bf16.mxu0 %v1137
        %1305 = vmatmul.mubr.bf16.gmra.mxu0 %v1136
        %v1306 = vpop.f32.mrf.mxu0
        %v1307 = vadd.f32 %v1175, %v1306
        %v1308 = vpop.f32.mrf.mxu0
        %v1309 = vpop.f32.mrf.mxu0
        %v1310 = vadd.f32 %v1175, %v1309
        %v1311 = vpop.f32.mrf.mxu0
        %1312 = vdwg.mxu0
        %v1313 = vmax.f32 %v1307, 0.0
        %v1314 = vmax.f32 %v1310, 0.0
        %v1315 = vrot.slane %v1313, 4
        %v1316 = vrot.slane %v1314, 4
        %v1317 = vsel %vm1129, %v1315, %v1316
        %v1318 = vsel %vm1129, %v1316, %v1315
        %v1319 = vsel %vm1132, %v1318, 0.0
        %v1320 = vsel %vm1133, %v1317, 0.0
        %v1321 = vpack.c.bf16 %v1320, %v1319
        %v1322 = vpack.c.bf16 %v1314, %v1313
        %s1323 = scalar_lea.vmem [#allocation5], 640
        %v1324 = vld [vmem:[%s1323] sm:$0xf]
        %v1325 = vld [vmem:[%s1323 + $0x4] sm:$0xf]
        %v1326 = vld [vmem:[%s1323 + $0x8] sm:$0xf]
        %v1327 = vld [vmem:[%s1323 + $0xc] sm:$0xf]
        %v1328 = vld [vmem:[%s1323 + $0x10] sm:$0xf]
        %v1329 = vld [vmem:[%s1323 + $0x14] sm:$0xf]
        %v1330 = vld [vmem:[%s1323 + $0x18] sm:$0xf]
        %v1331 = vld [vmem:[%s1323 + $0x1c] sm:$0xf]
        %v1332 = vld [vmem:[%s1323 + $0x20] sm:$0xf]
        %v1333 = vld [vmem:[%s1323 + $0x24] sm:$0xf]
        %v1334 = vld [vmem:[%s1323 + $0x28] sm:$0xf]
        %v1335 = vld [vmem:[%s1323 + $0x2c] sm:$0xf]
        %v1336 = vld [vmem:[%s1323 + $0x30] sm:$0xf]
        %v1337 = vld [vmem:[%s1323 + $0x34] sm:$0xf]
        %v1338 = vld [vmem:[%s1323 + $0x38] sm:$0xf]
        %v1339 = vld [vmem:[%s1323 + $0x3c] sm:$0xf]
        %v1340 = vld [vmem:[%s1323 + $0x40] sm:$0xf]
        %v1341 = vld [vmem:[%s1323 + $0x44] sm:$0xf]
        %v1342 = vld [vmem:[%s1323 + $0x48] sm:$0xf]
        %v1343 = vld [vmem:[%s1323 + $0x4c] sm:$0xf]
        %v1344 = vld [vmem:[%s1323 + $0x50] sm:$0xf]
        %v1345 = vld [vmem:[%s1323 + $0x54] sm:$0xf]
        %v1346 = vld [vmem:[%s1323 + $0x58] sm:$0xf]
        %v1347 = vld [vmem:[%s1323 + $0x5c] sm:$0xf]
        %v1348 = vld [vmem:[%s1323 + $0x60] sm:$0xf]
        %v1349 = vld [vmem:[%s1323 + $0x64] sm:$0xf]
        %v1350 = vld [vmem:[%s1323 + $0x68] sm:$0xf]
        %v1351 = vld [vmem:[%s1323 + $0x6c] sm:$0xf]
        %v1352 = vld [vmem:[%s1323 + $0x70] sm:$0xf]
        %v1353 = vld [vmem:[%s1323 + $0x74] sm:$0xf]
        %v1354 = vld [vmem:[%s1323 + $0x78] sm:$0xf]
        %v1355 = vld [vmem:[%s1323 + $0x7c] sm:$0xf]
        %v1356 = vld [vmem:[#allocation8 + $0x6] sm:$0x1]
        %v1357 = vlaneseq
        %v1358 = vshrl.u32 %v1357, 7
        %v1359 = vsub.s32 0, %v1358
        %v1360 = vrot.slane %v1356, %v1359
        %v1393 = vunpack.c.l.b16 %v1324
        %v1394 = vunpack.c.l.b16 %v1325
        %v1395 = vunpack.c.l.b16 %v1326
        %v1396 = vunpack.c.l.b16 %v1327
        %v1397 = vunpack.c.l.b16 %v1328
        %v1398 = vunpack.c.l.b16 %v1329
        %v1399 = vunpack.c.l.b16 %v1330
        %v1400 = vunpack.c.l.b16 %v1331
        %v1401 = vunpack.c.l.b16 %v1332
        %v1402 = vunpack.c.l.b16 %v1333
        %v1403 = vunpack.c.l.b16 %v1334
        %v1404 = vunpack.c.l.b16 %v1335
        %v1405 = vunpack.c.l.b16 %v1336
        %v1406 = vunpack.c.l.b16 %v1337
        %v1407 = vunpack.c.l.b16 %v1338
        %v1408 = vunpack.c.l.b16 %v1339
        %v1409 = vunpack.c.l.b16 %v1340
        %v1410 = vunpack.c.l.b16 %v1341
        %v1411 = vunpack.c.l.b16 %v1342
        %v1412 = vunpack.c.l.b16 %v1343
        %v1413 = vunpack.c.l.b16 %v1344
        %v1414 = vunpack.c.l.b16 %v1345
        %v1415 = vunpack.c.l.b16 %v1346
        %v1416 = vunpack.c.l.b16 %v1347
        %v1417 = vunpack.c.l.b16 %v1348
        %v1418 = vunpack.c.l.b16 %v1349
        %v1419 = vunpack.c.l.b16 %v1350
        %v1420 = vunpack.c.l.b16 %v1351
        %v1421 = vunpack.c.l.b16 %v1352
        %v1422 = vunpack.c.l.b16 %v1353
        %v1423 = vunpack.c.l.b16 %v1354
        %v1424 = vunpack.c.l.b16 %v1355
        %v1425 = vpack.c.b16 %v1394, %v1393
        %v1426 = vpack.c.b16 %v1396, %v1395
        %v1427 = vpack.c.b16 %v1398, %v1397
        %v1428 = vpack.c.b16 %v1400, %v1399
        %v1429 = vpack.c.b16 %v1402, %v1401
        %v1430 = vpack.c.b16 %v1404, %v1403
        %v1431 = vpack.c.b16 %v1406, %v1405
        %v1432 = vpack.c.b16 %v1408, %v1407
        %v1433 = vpack.c.b16 %v1410, %v1409
        %v1434 = vpack.c.b16 %v1412, %v1411
        %v1435 = vpack.c.b16 %v1414, %v1413
        %v1436 = vpack.c.b16 %v1416, %v1415
        %v1437 = vpack.c.b16 %v1418, %v1417
        %v1438 = vpack.c.b16 %v1420, %v1419
        %v1439 = vpack.c.b16 %v1422, %v1421
        %v1440 = vpack.c.b16 %v1424, %v1423
        %1457 = vmatprep.subr.bf16.mxu0 0
        %1458 = vmatpush1.bf16.msra.mxu0 %v1432
        %1459 = vmatprep.subr.bf16.mxu0 0
        %1460 = vmatpush1.bf16.msra.mxu0 %v1431
        %1461 = vmatprep.subr.bf16.mxu0 0
        %1462 = vmatpush1.bf16.msra.mxu0 %v1430
        %1463 = vmatprep.subr.bf16.mxu0 0
        %1464 = vmatpush1.bf16.msra.mxu0 %v1429
        %1465 = vmatprep.subr.bf16.mxu0 0
        %1466 = vmatpush1.bf16.msra.mxu0 %v1428
        %1467 = vmatprep.subr.bf16.mxu0 0
        %1468 = vmatpush1.bf16.msra.mxu0 %v1427
        %1469 = vmatprep.subr.bf16.mxu0 0
        %1470 = vmatpush1.bf16.msra.mxu0 %v1426
        %1471 = vmatprep.subr.bf16.mxu0 0
        %1472 = vmatpush1.bf16.msra.mxu0 %v1425
        %1473 = vmatprep.subr.bf16.mxu0 0
        %1474 = vmatpush2.bf16.msra.mxu0 %v1440
        %1475 = vmatprep.subr.bf16.mxu0 0
        %1476 = vmatpush2.bf16.msra.mxu0 %v1439
        %1477 = vmatprep.subr.bf16.mxu0 0
        %1478 = vmatpush2.bf16.msra.mxu0 %v1438
        %1479 = vmatprep.subr.bf16.mxu0 0
        %1480 = vmatpush2.bf16.msra.mxu0 %v1437
        %1481 = vmatprep.subr.bf16.mxu0 0
        %1482 = vmatpush2.bf16.msra.mxu0 %v1436
        %1483 = vmatprep.subr.bf16.mxu0 0
        %1484 = vmatpush2.bf16.msra.mxu0 %v1435
        %1485 = vmatprep.subr.bf16.mxu0 0
        %1486 = vmatpush2.bf16.msra.mxu0 %v1434
        %1487 = vmatprep.subr.bf16.mxu0 0
        %1488 = vmatpush2.bf16.msra.mxu0 %v1433
        %1489 = vmatprep.mubr.bf16.mxu0 %v1322
        %1490 = vmatmul.mubr.bf16.gmra.mxu0 %v1321
        %v1491 = vpop.f32.mrf.mxu0
        %v1492 = vadd.f32 %v1360, %v1491
        %v1493 = vpop.f32.mrf.mxu0
        %v1494 = vpop.f32.mrf.mxu0
        %v1495 = vadd.f32 %v1360, %v1494
        %v1496 = vpop.f32.mrf.mxu0
        %1497 = vdwg.mxu0
        %v1498 = vmax.f32 %v1492, 0.0
        %v1499 = vmax.f32 %v1495, 0.0
        %v1500 = vadd.f32 %v1498, %v1125
        %v1501 = vadd.f32 %v1499, %v1126
        %v1502 = vmax.f32 %v1500, 0.0
        %v1503 = vmax.f32 %v1501, 0.0
        %1504 = vst [vmem:[%s257] sm:$0xff] %v1502
        %1505 = vst [vmem:[%s257 + $0x8] sm:$0xff] %v1503
        %s1506 = sand.u32 %s120, 1
        %s1507 = scalar_lea.sflag [#allocation4], %s1506
        %s1508 = sand.u32 %s120, 1
        %s1509 = smul.addr %s1508, 16
        %s1510 = scalar_lea.vmem [#allocation10], %s1509
        // Predicated region
        $region53: #{tpu_custom_call.1} parent=35 // pred_check
          %p1511 = pneg %p130
        $region54: #{tpu_custom_call.1} parent=35 // pred_check_branch
          %1513 = sbr.rel (%p1511) target = $region56
        $region55: #{tpu_custom_call.1} parent=35 // pred_region
          %s1515 = ssub.s32 256, 256
          %1516 = vsyncadd %s1507, %s1515
          %s1517 = smul.addr %s23, 2
          %s1518 = smul.addr %s1517, 128
          %s1519 = scalar_lea.hbm %s4, %s1518
          %s1520 = sshll.u32 %s1510, 4
          %s1521 = int_to_ptr.vmem [resolvable:$true] %s1520
          %1526 = dma.vmem_to_hbm [thread:$0]  %s1521, 256, %s1519, %s1507, 128, 128, 8
        $region56: #{tpu_custom_call.1} parent=35 // pred_fallthru
          _
      $region36: #{tpu_custom_call.1} parent=5 // pred_fallthru
        _
      %p1527 = scmp.le.s32.totalorder 2, %s18
      // Predicated region
      $region57: #{tpu_custom_call.1} parent=5 // pred_check
        %p1528 = pneg %p1527
      $region58: #{tpu_custom_call.1} parent=5 // pred_check_branch
        %1530 = sbr.rel (%p1528) target = $region60
      $region59: #{tpu_custom_call.1} parent=5 // pred_region
        %s1531 = ssub.s32 %s18, 2
        // Predicated region
        $region61: #{tpu_custom_call.1} parent=59 // pred_check
          %p1532 = pneg %p136
        $region62: #{tpu_custom_call.1} parent=59 // pred_check_branch
          %1534 = sbr.rel (%p1532) target = $region64
        $region63: #{tpu_custom_call.1} parent=59 // pred_region
          %s1535 = sand.u32 %s121, 1
          %s1536 = scalar_lea.sflag [#allocation4], %s1535
          %s1537 = sand.u32 %s121, 1
          %s1538 = smul.addr %s1537, 16
          %s1539 = scalar_lea.vmem [#allocation10], %s1538
          %1540 = dma.done %s1536, 256
        $region64: #{tpu_custom_call.1} parent=59 // pred_fallthru
          _
      $region60: #{tpu_custom_call.1} parent=5 // pred_fallthru
        _
    $region6: #{tpu_custom_call.1} parent=1 // loop_footer
      %s22 = sadd.s32 1, %s18
    $region7: #{tpu_custom_call.1} parent=1 // loop_footer_branch
      %17 = sbr.rel target = $region3
    $region8: #{tpu_custom_call.1} parent=1 // loop_exit
      _
    %1541 = vsyncpa [#allocation3], 1
    %s1542 = scalar_lea.sflag [#allocation3], 1
    %1543 = vsyncpa %s1542, 1
    %1544 = vsyncpa [#allocation6], 1
    %1545 = vsyncpa [#allocation9], 1
    %1546 = vsyncpa [#allocation4], 1
    %s1547 = scalar_lea.sflag [#allocation4], 1
    %1548 = vsyncpa %s1547, 1

</llo_original>
